<compile_context>
chip_gen: v7x
topology: tpu7x:2x2x1
jax: 0.10.0
libtpu: 0.0.40
codegen_flags: <defaults>
</compile_context>

<pallas_src>
import math

import jax
import jax.numpy as jnp
from jax import lax
from jax.experimental import pallas as pl
from jax.experimental.pallas import tpu as pltpu


# ------------------------------ helpers --------------------------------------

def _rup128(n):
    return ((n + 127) // 128) * 128


def _pad2d(m, rows, cols):
    m = jnp.asarray(m, jnp.float32)
    r, c = m.shape
    if (r, c) == (rows, cols):
        return m
    return jnp.zeros((rows, cols), jnp.float32).at[:r, :c].set(m)


def _padded(m, b):
    """Zero-pad a dense (din, dout) affine map so both dims are 128-multiples."""
    din, dout = m.shape
    return (_pad2d(m, _rup128(din), _rup128(dout)),
            _pad2d(jnp.asarray(b, jnp.float32).reshape(1, -1), 1, _rup128(dout)))


# ------------------------- single fused Pallas kernel ------------------------

def _vae_kernel(x_ref, eps_ref,
                e1m, e1b, e2m, e2b,
                mum, mub, sgm, sgb,
                zhm, zhb,
                d1m, d1b, d2m, d2b, d3m, d3b, d4m, d4b,
                rzm,
                recon_ref, mu_ref, sigma_ref, z_ref):
    dot = lambda a, b: jnp.dot(a, b, preferred_element_type=jnp.float32)

    # ---- encoder: Conv(1->4,s2)+ReLU, Conv(4->8,s4)+ReLU (dense affine maps) ----
    x = x_ref[...]
    h = jnp.maximum(dot(x, e1m[...]) + e1b[...], 0.0)
    h = jnp.maximum(dot(h, e2m[...]) + e2b[...], 0.0)

    # ---- latent heads + reparametrize (eps supplied from outside) ----
    mu = dot(h, mum[...]) + mub[...]
    sg = dot(h, sgm[...]) + sgb[...]
    z = mu + eps_ref[...] * jnp.exp(0.5 * sg)

    # ---- decoder ----
    d = dot(z, zhm[...]) + zhb[...]                       # z_2hid
    d = dot(d, d1m[...]) + d1b[...]                       # ConvTranspose2d(8->4, s4)
    d = jnp.maximum(dot(d, d2m[...]) + d2b[...], 0.0)     # Conv2d(4->4, p1) + ReLU
    d = dot(d, d3m[...]) + d3b[...]                       # ConvTranspose2d(4->3, s2)
    d = jax.nn.sigmoid(dot(d, d4m[...]) + d4b[...])       # Conv2d(3->1, p1) + sigmoid
    recon_ref[...] = dot(d, rzm[...])                     # bilinear resize 15x15 -> 16x16

    mu_ref[...] = mu
    sigma_ref[...] = sg
    z_ref[...] = z


_PACK_ORDER = ("e1m", "e1b", "e2m", "e2b", "mum", "mub", "sgm", "sgb",
               "zhm", "zhb", "d1m", "d1b", "d2m", "d2b", "d3m", "d3b",
               "d4m", "d4b", "rzm")


def vae_forward(packed, x_nchw, eps):
    """Fused forward: one pallas_call.  Returns (recon, mu, sigma, z)."""
    B, _, H, W = x_nchw.shape
    x_flat = x_nchw.reshape(B, -1).astype(jnp.float32)   # NCHW flatten (torch order)
    Z = eps.shape[1]
    Zp = packed["mum"].shape[1]                          # padded latent width (128)
    Dout_p = packed["rzm"].shape[1]                      # padded recon width
    Dout = H * W

    # zero-pad eps to the padded latent width (padded lanes stay exactly 0 in z).
    eps_p = jnp.zeros((B, Zp), jnp.float32).at[:, :Z].set(eps.astype(jnp.float32))

    inputs = [x_flat, eps_p] + [packed[k] for k in _PACK_ORDER]
    in_specs = [pl.BlockSpec(a.shape, lambda i: (0, 0)) for a in inputs]
    out_specs = (pl.BlockSpec((B, Dout_p), lambda i: (0, 0)),
                 pl.BlockSpec((B, Zp), lambda i: (0, 0)),
                 pl.BlockSpec((B, Zp), lambda i: (0, 0)),
                 pl.BlockSpec((B, Zp), lambda i: (0, 0)))
    out_shapes = (jax.ShapeDtypeStruct((B, Dout_p), jnp.float32),
                  jax.ShapeDtypeStruct((B, Zp), jnp.float32),
                  jax.ShapeDtypeStruct((B, Zp), jnp.float32),
                  jax.ShapeDtypeStruct((B, Zp), jnp.float32))

    recon_flat, mu_p, sigma_p, z_p = pl.pallas_call(
        _vae_kernel,
        out_shape=out_shapes,
        grid=(1,),
        in_specs=in_specs,
        out_specs=out_specs,
        compiler_params=pltpu.CompilerParams(
            dimension_semantics=("arbitrary",)),
    )(*inputs)

    recon = recon_flat[:, :Dout].reshape(B, 1, H, W)
    return recon, mu_p[:, :Z], sigma_p[:, :Z], z_p[:, :Z]


# ------------------ init-time packing: convs -> dense matrices ---------------

def _conv_matrix(w, b, in_shape, stride, padding):
    """PyTorch Conv2d (OIHW weights) as a dense (Din, Dout) matrix on flat NCHW."""
    cin, h, wd = in_shape
    din = cin * h * wd
    basis = jnp.eye(din, dtype=jnp.float32).reshape(din, cin, h, wd)
    y = lax.conv_general_dilated(
        basis, w.astype(jnp.float32),
        window_strides=(stride, stride),
        padding=[(padding, padding), (padding, padding)],
        dimension_numbers=("NCHW", "OIHW", "NCHW"))
    cout, oh, ow = y.shape[1:]
    m = y.reshape(din, cout * oh * ow)
    bflat = jnp.broadcast_to(b.astype(jnp.float32)[:, None, None],
                             (cout, oh, ow)).reshape(1, -1)
    return m, bflat, (cout, oh, ow)


def _convT_matrix(w, b, in_shape, stride):
    """PyTorch ConvTranspose2d (IOHW weights, padding=0) as a dense matrix.

    Equivalent direct conv: dilate input by `stride`, pad by k-1, cross-correlate
    with the spatially-flipped kernel with in/out channels swapped.
    """
    cin, h, wd = in_shape
    k = w.shape[-1]
    din = cin * h * wd
    basis = jnp.eye(din, dtype=jnp.float32).reshape(din, cin, h, wd)
    w_eq = jnp.transpose(w.astype(jnp.float32), (1, 0, 2, 3))[:, :, ::-1, ::-1]
    y = lax.conv_general_dilated(
        basis, w_eq,
        window_strides=(1, 1),
        padding=[(k - 1, k - 1), (k - 1, k - 1)],
        lhs_dilation=(stride, stride),
        dimension_numbers=("NCHW", "OIHW", "NCHW"))
    cout, oh, ow = y.shape[1:]
    m = y.reshape(din, cout * oh * ow)
    bflat = jnp.broadcast_to(b.astype(jnp.float32)[:, None, None],
                             (cout, oh, ow)).reshape(1, -1)
    return m, bflat, (cout, oh, ow)


def _bilinear_matrix(out_size, in_size):
    """1-D interpolation matrix matching F.interpolate(mode='bilinear', align_corners=False)."""
    scale = in_size / out_size
    dst = jnp.arange(out_size, dtype=jnp.float32)
    src = jnp.maximum((dst + 0.5) * scale - 0.5, 0.0)
    i0 = jnp.minimum(jnp.floor(src).astype(jnp.int32), in_size - 1)
    i1 = jnp.minimum(i0 + 1, in_size - 1)
    w1 = jnp.clip(src - i0.astype(jnp.float32), 0.0, 1.0)
    w0 = 1.0 - w1
    a = jnp.zeros((out_size, in_size), jnp.float32)
    a = a.at[jnp.arange(out_size), i0].add(w0)
    a = a.at[jnp.arange(out_size), i1].add(w1)
    return a


def pack_params(raw, input_dim, z_dim, ch_start):
    eos = input_dim // 8
    p = {}
    m, bf, shp = _conv_matrix(raw["enc1_w"], raw["enc1_b"],
                              (1, input_dim, input_dim), stride=2, padding=0)
    p["e1m"], p["e1b"] = _padded(m, bf)
    m, bf, shp = _conv_matrix(raw["enc2_w"], raw["enc2_b"], shp, stride=4, padding=0)
    p["e2m"], p["e2b"] = _padded(m, bf)

    p["mum"], p["mub"] = _padded(raw["fc_mu_w"].T, raw["fc_mu_b"])
    p["sgm"], p["sgb"] = _padded(raw["fc_sg_w"].T, raw["fc_sg_b"])
    p["zhm"], p["zhb"] = _padded(raw["z2h_w"].T, raw["z2h_b"])

    m, bf, shp = _convT_matrix(raw["dec1_w"], raw["dec1_b"],
                               (ch_start * 2, eos, eos), stride=4)
    p["d1m"], p["d1b"] = _padded(m, bf)
    m, bf, shp = _conv_matrix(raw["dec2_w"], raw["dec2_b"], shp, stride=1, padding=1)
    p["d2m"], p["d2b"] = _padded(m, bf)
    m, bf, shp = _convT_matrix(raw["dec3_w"], raw["dec3_b"], shp, stride=2)
    p["d3m"], p["d3b"] = _padded(m, bf)
    m, bf, shp = _conv_matrix(raw["dec4_w"], raw["dec4_b"], shp, stride=1, padding=1)
    p["d4m"], p["d4b"] = _padded(m, bf)

    # bilinear resize of the single-channel decoder output to (input_dim, input_dim)
    cout, oh, ow = shp
    assert cout == 1
    ah = _bilinear_matrix(input_dim, oh)
    aw = _bilinear_matrix(input_dim, ow)
    rz = jnp.kron(ah, aw).T                         # (oh*ow, input_dim*input_dim)
    p["rzm"] = _pad2d(rz, _rup128(rz.shape[0]), _rup128(rz.shape[1]))
    return p


# ----------------------------- raw PyTorch-style init ------------------------

def _uniform(key, shape, bound):
    return jax.random.uniform(key, shape, jnp.float32, -bound, bound)


def init_params(key, input_dim, z_dim, ch_start):
    eos = input_dim // 8
    h_dim = ch_start * 2 * eos * eos
    ks = jax.random.split(key, 18)

    def conv_init(kw, kb, cout, cin, k):
        bound = 1.0 / math.sqrt(cin * k * k)
        return _uniform(kw, (cout, cin, k, k), bound), _uniform(kb, (cout,), bound)

    def convT_init(kw, kb, cin, cout, k):
        bound = 1.0 / math.sqrt(cout * k * k)
        return _uniform(kw, (cin, cout, k, k), bound), _uniform(kb, (cout,), bound)

    def lin_init(kw, kb, out_f, in_f):
        bound = 1.0 / math.sqrt(in_f)
        return _uniform(kw, (out_f, in_f), bound), _uniform(kb, (out_f,), bound)

    p = {}
    p["enc1_w"], p["enc1_b"] = conv_init(ks[0], ks[1], ch_start, 1, 3)
    p["enc2_w"], p["enc2_b"] = conv_init(ks[2], ks[3], ch_start * 2, ch_start, 3)
    p["fc_mu_w"], p["fc_mu_b"] = lin_init(ks[4], ks[5], z_dim, h_dim)
    p["fc_sg_w"], p["fc_sg_b"] = lin_init(ks[6], ks[7], z_dim, h_dim)
    p["z2h_w"], p["z2h_b"] = lin_init(ks[8], ks[9], h_dim, z_dim)
    p["dec1_w"], p["dec1_b"] = convT_init(ks[10], ks[11], ch_start * 2, ch_start, 3)
    p["dec2_w"], p["dec2_b"] = conv_init(ks[12], ks[13], ch_start, ch_start, 3)
    p["dec3_w"], p["dec3_b"] = convT_init(ks[14], ks[15], ch_start, 3, 3)
    p["dec4_w"], p["dec4_b"] = conv_init(ks[16], ks[17], 1, 3, 3)
    return p


# --------------------------------- main --------------------------------------

if __name__ == "__main__":
    INPUT_DIM, Z_DIM, CH_START, BATCH = 16, 16, 4, 2

    root = jax.random.PRNGKey(0)
    k_param, k_x, k_eps = jax.random.split(root, 3)

    raw_params = init_params(k_param, INPUT_DIM, Z_DIM, CH_START)
    packed = pack_params(raw_params, INPUT_DIM, Z_DIM, CH_START)   # one-time layout work
    packed = jax.device_put(packed)

    x = jax.random.normal(k_x, (BATCH, 1, INPUT_DIM, INPUT_DIM), jnp.float32)
    # TODO(synk): torch.randn_like inside reparametrize is emulated by an explicit eps input.
    eps = jax.random.normal(k_eps, (BATCH, Z_DIM), jnp.float32)

    fwd = jax.jit(vae_forward)
    recon, mu, sigma, z = fwd(packed, x, eps)
    jax.block_until_ready((recon, mu, sigma, z))

    assert recon.shape == (BATCH, 1, INPUT_DIM, INPUT_DIM)
    assert mu.shape == (BATCH, Z_DIM) and sigma.shape == (BATCH, Z_DIM)
    assert z.shape == (BATCH, Z_DIM)
    assert bool(jnp.all(jnp.isfinite(recon)))
    assert bool(jnp.all(jnp.isfinite(mu))) and bool(jnp.all(jnp.isfinite(sigma)))
    # sigmoid + convex bilinear weights keep the reconstruction inside [0, 1]
    assert bool(jnp.all((recon >= -1e-6) & (recon <= 1.0 + 1e-6)))
    print("KERNEL_OK")
</pallas_src>

<mosaic_0001>
module attributes {stable_mosaic.version = 11 : i64} {
  func.func @_vae_kernel(%arg0: i32, %arg1: memref<2x256xf32, #tpu.memory_space<vmem>>, %arg2: memref<2x128xf32, #tpu.memory_space<vmem>>, %arg3: memref<256x256xf32, #tpu.memory_space<vmem>>, %arg4: memref<1x256xf32, #tpu.memory_space<vmem>>, %arg5: memref<256x128xf32, #tpu.memory_space<vmem>>, %arg6: memref<1x128xf32, #tpu.memory_space<vmem>>, %arg7: memref<128x128xf32, #tpu.memory_space<vmem>>, %arg8: memref<1x128xf32, #tpu.memory_space<vmem>>, %arg9: memref<128x128xf32, #tpu.memory_space<vmem>>, %arg10: memref<1x128xf32, #tpu.memory_space<vmem>>, %arg11: memref<128x128xf32, #tpu.memory_space<vmem>>, %arg12: memref<1x128xf32, #tpu.memory_space<vmem>>, %arg13: memref<128x256xf32, #tpu.memory_space<vmem>>, %arg14: memref<1x256xf32, #tpu.memory_space<vmem>>, %arg15: memref<256x256xf32, #tpu.memory_space<vmem>>, %arg16: memref<1x256xf32, #tpu.memory_space<vmem>>, %arg17: memref<256x768xf32, #tpu.memory_space<vmem>>, %arg18: memref<1x768xf32, #tpu.memory_space<vmem>>, %arg19: memref<768x256xf32, #tpu.memory_space<vmem>>, %arg20: memref<1x256xf32, #tpu.memory_space<vmem>>, %arg21: memref<256x256xf32, #tpu.memory_space<vmem>>, %arg22: memref<2x256xf32, #tpu.memory_space<vmem>>, %arg23: memref<2x128xf32, #tpu.memory_space<vmem>>, %arg24: memref<2x128xf32, #tpu.memory_space<vmem>>, %arg25: memref<2x128xf32, #tpu.memory_space<vmem>>) attributes {dimension_semantics = [#tpu.dimension_semantics<arbitrary>], iteration_bounds = array<i64: 1>, scalar_prefetch = 0 : i64, scratch_operands = 0 : i64, tpu.core_type = #tpu.core_type<tc>, window_params = [{pipeline_mode = #tpu.pipeline_mode<synchronous>, transform_indices = @transform_0, window_bounds = array<i64: 2, 256>}, {pipeline_mode = #tpu.pipeline_mode<synchronous>, transform_indices = @transform_1, window_bounds = array<i64: 2, 128>}, {pipeline_mode = #tpu.pipeline_mode<synchronous>, transform_indices = @transform_2, window_bounds = array<i64: 256, 256>}, {pipeline_mode = #tpu.pipeline_mode<synchronous>, transform_indices = @transform_3, window_bounds = array<i64: 1, 256>}, {pipeline_mode = #tpu.pipeline_mode<synchronous>, transform_indices = @transform_4, window_bounds = array<i64: 256, 128>}, {pipeline_mode = #tpu.pipeline_mode<synchronous>, transform_indices = @transform_5, window_bounds = array<i64: 1, 128>}, {pipeline_mode = #tpu.pipeline_mode<synchronous>, transform_indices = @transform_6, window_bounds = array<i64: 128, 128>}, {pipeline_mode = #tpu.pipeline_mode<synchronous>, transform_indices = @transform_7, window_bounds = array<i64: 1, 128>}, {pipeline_mode = #tpu.pipeline_mode<synchronous>, transform_indices = @transform_8, window_bounds = array<i64: 128, 128>}, {pipeline_mode = #tpu.pipeline_mode<synchronous>, transform_indices = @transform_9, window_bounds = array<i64: 1, 128>}, {pipeline_mode = #tpu.pipeline_mode<synchronous>, transform_indices = @transform_10, window_bounds = array<i64: 128, 128>}, {pipeline_mode = #tpu.pipeline_mode<synchronous>, transform_indices = @transform_11, window_bounds = array<i64: 1, 128>}, {pipeline_mode = #tpu.pipeline_mode<synchronous>, transform_indices = @transform_12, window_bounds = array<i64: 128, 256>}, {pipeline_mode = #tpu.pipeline_mode<synchronous>, transform_indices = @transform_13, window_bounds = array<i64: 1, 256>}, {pipeline_mode = #tpu.pipeline_mode<synchronous>, transform_indices = @transform_14, window_bounds = array<i64: 256, 256>}, {pipeline_mode = #tpu.pipeline_mode<synchronous>, transform_indices = @transform_15, window_bounds = array<i64: 1, 256>}, {pipeline_mode = #tpu.pipeline_mode<synchronous>, transform_indices = @transform_16, window_bounds = array<i64: 256, 768>}, {pipeline_mode = #tpu.pipeline_mode<synchronous>, transform_indices = @transform_17, window_bounds = array<i64: 1, 768>}, {pipeline_mode = #tpu.pipeline_mode<synchronous>, transform_indices = @transform_18, window_bounds = array<i64: 768, 256>}, {pipeline_mode = #tpu.pipeline_mode<synchronous>, transform_indices = @transform_19, window_bounds = array<i64: 1, 256>}, {pipeline_mode = #tpu.pipeline_mode<synchronous>, transform_indices = @transform_20, window_bounds = array<i64: 256, 256>}, {pipeline_mode = #tpu.pipeline_mode<synchronous>, transform_indices = @transform_21, window_bounds = array<i64: 2, 256>}, {pipeline_mode = #tpu.pipeline_mode<synchronous>, transform_indices = @transform_22, window_bounds = array<i64: 2, 128>}, {pipeline_mode = #tpu.pipeline_mode<synchronous>, transform_indices = @transform_23, window_bounds = array<i64: 2, 128>}, {pipeline_mode = #tpu.pipeline_mode<synchronous>, transform_indices = @transform_24, window_bounds = array<i64: 2, 128>}]} {
    %c0 = arith.constant 0 : index
    %c0_0 = arith.constant 0 : index
    %0 = vector.load %arg1[%c0, %c0_0] : memref<2x256xf32, #tpu.memory_space<vmem>>, vector<2x256xf32>
    %c0_1 = arith.constant 0 : index
    %c0_2 = arith.constant 0 : index
    %1 = vector.load %arg3[%c0_1, %c0_2] : memref<256x256xf32, #tpu.memory_space<vmem>>, vector<256x256xf32>
    %cst = arith.constant dense<0.000000e+00> : vector<2x256xf32>
    %2 = tpu.matmul %0, %1, %cst {dimension_numbers = #tpu.dot_dimension_numbers<[1], [0], [0], [1], [0, 0, 1, 1], [], []>} : vector<2x256xf32>, vector<256x256xf32>, vector<2x256xf32> -> vector<2x256xf32>
    %c0_3 = arith.constant 0 : index
    %c0_4 = arith.constant 0 : index
    %3 = vector.load %arg4[%c0_3, %c0_4] : memref<1x256xf32, #tpu.memory_space<vmem>>, vector<1x256xf32>
    %4 = vector.broadcast %3 : vector<1x256xf32> to vector<2x256xf32>
    %5 = arith.addf %2, %4 : vector<2x256xf32>
    %cst_5 = arith.constant 0.000000e+00 : f32
    %6 = vector.broadcast %cst_5 : f32 to vector<2x256xf32>
    %7 = arith.maximumf %5, %6 : vector<2x256xf32>
    %c0_6 = arith.constant 0 : index
    %c0_7 = arith.constant 0 : index
    %8 = vector.load %arg5[%c0_6, %c0_7] : memref<256x128xf32, #tpu.memory_space<vmem>>, vector<256x128xf32>
    %cst_8 = arith.constant dense<0.000000e+00> : vector<2x128xf32>
    %9 = tpu.matmul %7, %8, %cst_8 {dimension_numbers = #tpu.dot_dimension_numbers<[1], [0], [0], [1], [0, 0, 1, 1], [], []>} : vector<2x256xf32>, vector<256x128xf32>, vector<2x128xf32> -> vector<2x128xf32>
    %c0_9 = arith.constant 0 : index
    %c0_10 = arith.constant 0 : index
    %10 = vector.load %arg6[%c0_9, %c0_10] : memref<1x128xf32, #tpu.memory_space<vmem>>, vector<1x128xf32>
    %11 = vector.broadcast %10 : vector<1x128xf32> to vector<2x128xf32>
    %12 = arith.addf %9, %11 : vector<2x128xf32>
    %cst_11 = arith.constant 0.000000e+00 : f32
    %13 = vector.broadcast %cst_11 : f32 to vector<2x128xf32>
    %14 = arith.maximumf %12, %13 : vector<2x128xf32>
    %c0_12 = arith.constant 0 : index
    %c0_13 = arith.constant 0 : index
    %15 = vector.load %arg7[%c0_12, %c0_13] : memref<128x128xf32, #tpu.memory_space<vmem>>, vector<128x128xf32>
    %cst_14 = arith.constant dense<0.000000e+00> : vector<2x128xf32>
    %16 = tpu.matmul %14, %15, %cst_14 {dimension_numbers = #tpu.dot_dimension_numbers<[1], [0], [0], [1], [0, 0, 1, 1], [], []>} : vector<2x128xf32>, vector<128x128xf32>, vector<2x128xf32> -> vector<2x128xf32>
    %c0_15 = arith.constant 0 : index
    %c0_16 = arith.constant 0 : index
    %17 = vector.load %arg8[%c0_15, %c0_16] : memref<1x128xf32, #tpu.memory_space<vmem>>, vector<1x128xf32>
    %18 = vector.broadcast %17 : vector<1x128xf32> to vector<2x128xf32>
    %19 = arith.addf %16, %18 : vector<2x128xf32>
    %c0_17 = arith.constant 0 : index
    %c0_18 = arith.constant 0 : index
    %20 = vector.load %arg9[%c0_17, %c0_18] : memref<128x128xf32, #tpu.memory_space<vmem>>, vector<128x128xf32>
    %cst_19 = arith.constant dense<0.000000e+00> : vector<2x128xf32>
    %21 = tpu.matmul %14, %20, %cst_19 {dimension_numbers = #tpu.dot_dimension_numbers<[1], [0], [0], [1], [0, 0, 1, 1], [], []>} : vector<2x128xf32>, vector<128x128xf32>, vector<2x128xf32> -> vector<2x128xf32>
    %c0_20 = arith.constant 0 : index
    %c0_21 = arith.constant 0 : index
    %22 = vector.load %arg10[%c0_20, %c0_21] : memref<1x128xf32, #tpu.memory_space<vmem>>, vector<1x128xf32>
    %23 = vector.broadcast %22 : vector<1x128xf32> to vector<2x128xf32>
    %24 = arith.addf %21, %23 : vector<2x128xf32>
    %c0_22 = arith.constant 0 : index
    %c0_23 = arith.constant 0 : index
    %25 = vector.load %arg2[%c0_22, %c0_23] : memref<2x128xf32, #tpu.memory_space<vmem>>, vector<2x128xf32>
    %cst_24 = arith.constant 5.000000e-01 : f32
    %26 = vector.broadcast %cst_24 : f32 to vector<2x128xf32>
    %27 = arith.mulf %26, %24 : vector<2x128xf32>
    %28 = math.exp %27 : vector<2x128xf32>
    %29 = arith.mulf %25, %28 : vector<2x128xf32>
    %30 = arith.addf %19, %29 : vector<2x128xf32>
    %c0_25 = arith.constant 0 : index
    %c0_26 = arith.constant 0 : index
    %31 = vector.load %arg11[%c0_25, %c0_26] : memref<128x128xf32, #tpu.memory_space<vmem>>, vector<128x128xf32>
    %cst_27 = arith.constant dense<0.000000e+00> : vector<2x128xf32>
    %32 = tpu.matmul %30, %31, %cst_27 {dimension_numbers = #tpu.dot_dimension_numbers<[1], [0], [0], [1], [0, 0, 1, 1], [], []>} : vector<2x128xf32>, vector<128x128xf32>, vector<2x128xf32> -> vector<2x128xf32>
    %c0_28 = arith.constant 0 : index
    %c0_29 = arith.constant 0 : index
    %33 = vector.load %arg12[%c0_28, %c0_29] : memref<1x128xf32, #tpu.memory_space<vmem>>, vector<1x128xf32>
    %34 = vector.broadcast %33 : vector<1x128xf32> to vector<2x128xf32>
    %35 = arith.addf %32, %34 : vector<2x128xf32>
    %c0_30 = arith.constant 0 : index
    %c0_31 = arith.constant 0 : index
    %36 = vector.load %arg13[%c0_30, %c0_31] : memref<128x256xf32, #tpu.memory_space<vmem>>, vector<128x256xf32>
    %cst_32 = arith.constant dense<0.000000e+00> : vector<2x256xf32>
    %37 = tpu.matmul %35, %36, %cst_32 {dimension_numbers = #tpu.dot_dimension_numbers<[1], [0], [0], [1], [0, 0, 1, 1], [], []>} : vector<2x128xf32>, vector<128x256xf32>, vector<2x256xf32> -> vector<2x256xf32>
    %c0_33 = arith.constant 0 : index
    %c0_34 = arith.constant 0 : index
    %38 = vector.load %arg14[%c0_33, %c0_34] : memref<1x256xf32, #tpu.memory_space<vmem>>, vector<1x256xf32>
    %39 = vector.broadcast %38 : vector<1x256xf32> to vector<2x256xf32>
    %40 = arith.addf %37, %39 : vector<2x256xf32>
    %c0_35 = arith.constant 0 : index
    %c0_36 = arith.constant 0 : index
    %41 = vector.load %arg15[%c0_35, %c0_36] : memref<256x256xf32, #tpu.memory_space<vmem>>, vector<256x256xf32>
    %cst_37 = arith.constant dense<0.000000e+00> : vector<2x256xf32>
    %42 = tpu.matmul %40, %41, %cst_37 {dimension_numbers = #tpu.dot_dimension_numbers<[1], [0], [0], [1], [0, 0, 1, 1], [], []>} : vector<2x256xf32>, vector<256x256xf32>, vector<2x256xf32> -> vector<2x256xf32>
    %c0_38 = arith.constant 0 : index
    %c0_39 = arith.constant 0 : index
    %43 = vector.load %arg16[%c0_38, %c0_39] : memref<1x256xf32, #tpu.memory_space<vmem>>, vector<1x256xf32>
    %44 = vector.broadcast %43 : vector<1x256xf32> to vector<2x256xf32>
    %45 = arith.addf %42, %44 : vector<2x256xf32>
    %cst_40 = arith.constant 0.000000e+00 : f32
    %46 = vector.broadcast %cst_40 : f32 to vector<2x256xf32>
    %47 = arith.maximumf %45, %46 : vector<2x256xf32>
    %c0_41 = arith.constant 0 : index
    %c0_42 = arith.constant 0 : index
    %48 = vector.load %arg17[%c0_41, %c0_42] : memref<256x768xf32, #tpu.memory_space<vmem>>, vector<256x768xf32>
    %cst_43 = arith.constant dense<0.000000e+00> : vector<2x768xf32>
    %49 = tpu.matmul %47, %48, %cst_43 {dimension_numbers = #tpu.dot_dimension_numbers<[1], [0], [0], [1], [0, 0, 1, 1], [], []>} : vector<2x256xf32>, vector<256x768xf32>, vector<2x768xf32> -> vector<2x768xf32>
    %c0_44 = arith.constant 0 : index
    %c0_45 = arith.constant 0 : index
    %50 = vector.load %arg18[%c0_44, %c0_45] : memref<1x768xf32, #tpu.memory_space<vmem>>, vector<1x768xf32>
    %51 = vector.broadcast %50 : vector<1x768xf32> to vector<2x768xf32>
    %52 = arith.addf %49, %51 : vector<2x768xf32>
    %c0_46 = arith.constant 0 : index
    %c0_47 = arith.constant 0 : index
    %53 = vector.load %arg19[%c0_46, %c0_47] : memref<768x256xf32, #tpu.memory_space<vmem>>, vector<768x256xf32>
    %cst_48 = arith.constant dense<0.000000e+00> : vector<2x256xf32>
    %54 = tpu.matmul %52, %53, %cst_48 {dimension_numbers = #tpu.dot_dimension_numbers<[1], [0], [0], [1], [0, 0, 1, 1], [], []>} : vector<2x768xf32>, vector<768x256xf32>, vector<2x256xf32> -> vector<2x256xf32>
    %c0_49 = arith.constant 0 : index
    %c0_50 = arith.constant 0 : index
    %55 = vector.load %arg20[%c0_49, %c0_50] : memref<1x256xf32, #tpu.memory_space<vmem>>, vector<1x256xf32>
    %56 = vector.broadcast %55 : vector<1x256xf32> to vector<2x256xf32>
    %57 = arith.addf %54, %56 : vector<2x256xf32>
    %58 = arith.negf %57 : vector<2x256xf32>
    %59 = math.exp %58 : vector<2x256xf32>
    %cst_51 = arith.constant 1.000000e+00 : f32
    %60 = vector.broadcast %cst_51 : f32 to vector<2x256xf32>
    %61 = arith.addf %60, %59 : vector<2x256xf32>
    %62 = arith.divf %60, %61 : vector<2x256xf32>
    %c0_52 = arith.constant 0 : index
    %c0_53 = arith.constant 0 : index
    %63 = vector.load %arg21[%c0_52, %c0_53] : memref<256x256xf32, #tpu.memory_space<vmem>>, vector<256x256xf32>
    %cst_54 = arith.constant dense<0.000000e+00> : vector<2x256xf32>
    %64 = tpu.matmul %62, %63, %cst_54 {dimension_numbers = #tpu.dot_dimension_numbers<[1], [0], [0], [1], [0, 0, 1, 1], [], []>} : vector<2x256xf32>, vector<256x256xf32>, vector<2x256xf32> -> vector<2x256xf32>
    %c0_55 = arith.constant 0 : index
    %c0_56 = arith.constant 0 : index
    %65 = vector.load %arg22[%c0_55, %c0_56] : memref<2x256xf32, #tpu.memory_space<vmem>>, vector<2x256xf32>
    tpu.vector_store %arg22[%c0_55, %c0_56], %64 {strides = array<i32>} : memref<2x256xf32, #tpu.memory_space<vmem>>, vector<2x256xf32>,
    %c0_57 = arith.constant 0 : index
    %c0_58 = arith.constant 0 : index
    %66 = vector.load %arg23[%c0_57, %c0_58] : memref<2x128xf32, #tpu.memory_space<vmem>>, vector<2x128xf32>
    tpu.vector_store %arg23[%c0_57, %c0_58], %19 {strides = array<i32>} : memref<2x128xf32, #tpu.memory_space<vmem>>, vector<2x128xf32>,
    %c0_59 = arith.constant 0 : index
    %c0_60 = arith.constant 0 : index
    %67 = vector.load %arg24[%c0_59, %c0_60] : memref<2x128xf32, #tpu.memory_space<vmem>>, vector<2x128xf32>
    tpu.vector_store %arg24[%c0_59, %c0_60], %24 {strides = array<i32>} : memref<2x128xf32, #tpu.memory_space<vmem>>, vector<2x128xf32>,
    %c0_61 = arith.constant 0 : index
    %c0_62 = arith.constant 0 : index
    %68 = vector.load %arg25[%c0_61, %c0_62] : memref<2x128xf32, #tpu.memory_space<vmem>>, vector<2x128xf32>
    tpu.vector_store %arg25[%c0_61, %c0_62], %30 {strides = array<i32>} : memref<2x128xf32, #tpu.memory_space<vmem>>, vector<2x128xf32>,
    return
  }
  func.func @transform_0(%arg0: i32) -> (i32, i32) {
    %c0_i32 = arith.constant 0 : i32
    %c0_i32_0 = arith.constant 0 : i32
    %c0_i32_1 = arith.constant 0 : i32
    return %c0_i32, %c0_i32_0 : i32, i32
  }
  func.func @transform_1(%arg0: i32) -> (i32, i32) {
    %c0_i32 = arith.constant 0 : i32
    %c0_i32_0 = arith.constant 0 : i32
    %c0_i32_1 = arith.constant 0 : i32
    return %c0_i32, %c0_i32_0 : i32, i32
  }
  func.func @transform_2(%arg0: i32) -> (i32, i32) {
    %c0_i32 = arith.constant 0 : i32
    %c0_i32_0 = arith.constant 0 : i32
    %c0_i32_1 = arith.constant 0 : i32
    return %c0_i32, %c0_i32_0 : i32, i32
  }
  func.func @transform_3(%arg0: i32) -> (i32, i32) {
    %c0_i32 = arith.constant 0 : i32
    %c0_i32_0 = arith.constant 0 : i32
    %c0_i32_1 = arith.constant 0 : i32
    return %c0_i32, %c0_i32_0 : i32, i32
  }
  func.func @transform_4(%arg0: i32) -> (i32, i32) {
    %c0_i32 = arith.constant 0 : i32
    %c0_i32_0 = arith.constant 0 : i32
    %c0_i32_1 = arith.constant 0 : i32
    return %c0_i32, %c0_i32_0 : i32, i32
  }
  func.func @transform_5(%arg0: i32) -> (i32, i32) {
    %c0_i32 = arith.constant 0 : i32
    %c0_i32_0 = arith.constant 0 : i32
    %c0_i32_1 = arith.constant 0 : i32
    return %c0_i32, %c0_i32_0 : i32, i32
  }
  func.func @transform_6(%arg0: i32) -> (i32, i32) {
    %c0_i32 = arith.constant 0 : i32
    %c0_i32_0 = arith.constant 0 : i32
    %c0_i32_1 = arith.constant 0 : i32
    return %c0_i32, %c0_i32_0 : i32, i32
  }
  func.func @transform_7(%arg0: i32) -> (i32, i32) {
    %c0_i32 = arith.constant 0 : i32
    %c0_i32_0 = arith.constant 0 : i32
    %c0_i32_1 = arith.constant 0 : i32
    return %c0_i32, %c0_i32_0 : i32, i32
  }
  func.func @transform_8(%arg0: i32) -> (i32, i32) {
    %c0_i32 = arith.constant 0 : i32
    %c0_i32_0 = arith.constant 0 : i32
    %c0_i32_1 = arith.constant 0 : i32
    return %c0_i32, %c0_i32_0 : i32, i32
  }
  func.func @transform_9(%arg0: i32) -> (i32, i32) {
    %c0_i32 = arith.constant 0 : i32
    %c0_i32_0 = arith.constant 0 : i32
    %c0_i32_1 = arith.constant 0 : i32
    return %c0_i32, %c0_i32_0 : i32, i32
  }
  func.func @transform_10(%arg0: i32) -> (i32, i32) {
    %c0_i32 = arith.constant 0 : i32
    %c0_i32_0 = arith.constant 0 : i32
    %c0_i32_1 = arith.constant 0 : i32
    return %c0_i32, %c0_i32_0 : i32, i32
  }
  func.func @transform_11(%arg0: i32) -> (i32, i32) {
    %c0_i32 = arith.constant 0 : i32
    %c0_i32_0 = arith.constant 0 : i32
    %c0_i32_1 = arith.constant 0 : i32
    return %c0_i32, %c0_i32_0 : i32, i32
  }
  func.func @transform_12(%arg0: i32) -> (i32, i32) {
    %c0_i32 = arith.constant 0 : i32
    %c0_i32_0 = arith.constant 0 : i32
    %c0_i32_1 = arith.constant 0 : i32
    return %c0_i32, %c0_i32_0 : i32, i32
  }
  func.func @transform_13(%arg0: i32) -> (i32, i32) {
    %c0_i32 = arith.constant 0 : i32
    %c0_i32_0 = arith.constant 0 : i32
    %c0_i32_1 = arith.constant 0 : i32
    return %c0_i32, %c0_i32_0 : i32, i32
  }
  func.func @transform_14(%arg0: i32) -> (i32, i32) {
    %c0_i32 = arith.constant 0 : i32
    %c0_i32_0 = arith.constant 0 : i32
    %c0_i32_1 = arith.constant 0 : i32
    return %c0_i32, %c0_i32_0 : i32, i32
  }
  func.func @transform_15(%arg0: i32) -> (i32, i32) {
    %c0_i32 = arith.constant 0 : i32
    %c0_i32_0 = arith.constant 0 : i32
    %c0_i32_1 = arith.constant 0 : i32
    return %c0_i32, %c0_i32_0 : i32, i32
  }
  func.func @transform_16(%arg0: i32) -> (i32, i32) {
    %c0_i32 = arith.constant 0 : i32
    %c0_i32_0 = arith.constant 0 : i32
    %c0_i32_1 = arith.constant 0 : i32
    return %c0_i32, %c0_i32_0 : i32, i32
  }
  func.func @transform_17(%arg0: i32) -> (i32, i32) {
    %c0_i32 = arith.constant 0 : i32
    %c0_i32_0 = arith.constant 0 : i32
    %c0_i32_1 = arith.constant 0 : i32
    return %c0_i32, %c0_i32_0 : i32, i32
  }
  func.func @transform_18(%arg0: i32) -> (i32, i32) {
    %c0_i32 = arith.constant 0 : i32
    %c0_i32_0 = arith.constant 0 : i32
    %c0_i32_1 = arith.constant 0 : i32
    return %c0_i32, %c0_i32_0 : i32, i32
  }
  func.func @transform_19(%arg0: i32) -> (i32, i32) {
    %c0_i32 = arith.constant 0 : i32
    %c0_i32_0 = arith.constant 0 : i32
    %c0_i32_1 = arith.constant 0 : i32
    return %c0_i32, %c0_i32_0 : i32, i32
  }
  func.func @transform_20(%arg0: i32) -> (i32, i32) {
    %c0_i32 = arith.constant 0 : i32
    %c0_i32_0 = arith.constant 0 : i32
    %c0_i32_1 = arith.constant 0 : i32
    return %c0_i32, %c0_i32_0 : i32, i32
  }
  func.func @transform_21(%arg0: i32) -> (i32, i32) {
    %c0_i32 = arith.constant 0 : i32
    %c0_i32_0 = arith.constant 0 : i32
    %c0_i32_1 = arith.constant 0 : i32
    return %c0_i32, %c0_i32_0 : i32, i32
  }
  func.func @transform_22(%arg0: i32) -> (i32, i32) {
    %c0_i32 = arith.constant 0 : i32
    %c0_i32_0 = arith.constant 0 : i32
    %c0_i32_1 = arith.constant 0 : i32
    return %c0_i32, %c0_i32_0 : i32, i32
  }
  func.func @transform_23(%arg0: i32) -> (i32, i32) {
    %c0_i32 = arith.constant 0 : i32
    %c0_i32_0 = arith.constant 0 : i32
    %c0_i32_1 = arith.constant 0 : i32
    return %c0_i32, %c0_i32_0 : i32, i32
  }
  func.func @transform_24(%arg0: i32) -> (i32, i32) {
    %c0_i32 = arith.constant 0 : i32
    %c0_i32_0 = arith.constant 0 : i32
    %c0_i32_1 = arith.constant 0 : i32
    return %c0_i32, %c0_i32_0 : i32, i32
  }
}

</mosaic_0001>

<llo_original>
// kernel: vae_forward.1
$region0: #{vae_forward.1}
  #allocation0 [shape = 'u32[]', space=smem, size = 0x4, offset = 0x4, fixed_abs, tag = 'smem constant byte address 0x4 - core index']
  #allocation1 [shape = 'u32[144,128]{1,0:T(1,128)}', space=vmem, size = 0x12000, scoped, tag = 'internal scratch']
  %s0 = inlined_call_operand.vmem [shape: f32[2,256], index: 0, kind: input, shape index: {}]
  %s1 = inlined_call_operand.vmem [shape: f32[2,128], index: 1, kind: input, shape index: {}]
  %s2 = inlined_call_operand.hbm [shape: f32[256,256], index: 2, kind: input, shape index: {}]
  %s3 = inlined_call_operand.vmem [shape: f32[1,256], index: 3, kind: input, shape index: {}]
  %s4 = inlined_call_operand.hbm [shape: f32[256,128], index: 4, kind: input, shape index: {}]
  %s5 = inlined_call_operand.vmem [shape: f32[1,128], index: 5, kind: input, shape index: {}]
  %s6 = inlined_call_operand.hbm [shape: f32[128,128], index: 6, kind: input, shape index: {}]
  %s7 = inlined_call_operand.vmem [shape: f32[1,128], index: 7, kind: input, shape index: {}]
  %s8 = inlined_call_operand.hbm [shape: f32[128,128], index: 8, kind: input, shape index: {}]
  %s9 = inlined_call_operand.vmem [shape: f32[1,128], index: 9, kind: input, shape index: {}]
  %s10 = inlined_call_operand.hbm [shape: f32[128,128], index: 10, kind: input, shape index: {}]
  %s11 = inlined_call_operand.vmem [shape: f32[1,128], index: 11, kind: input, shape index: {}]
  %s12 = inlined_call_operand.hbm [shape: f32[128,256], index: 12, kind: input, shape index: {}]
  %s13 = inlined_call_operand.vmem [shape: f32[1,256], index: 13, kind: input, shape index: {}]
  %s14 = inlined_call_operand.hbm [shape: f32[256,256], index: 14, kind: input, shape index: {}]
  %s15 = inlined_call_operand.vmem [shape: f32[1,256], index: 15, kind: input, shape index: {}]
  %s16 = inlined_call_operand.hbm [shape: f32[256,768], index: 16, kind: input, shape index: {}]
  %s17 = inlined_call_operand.vmem [shape: f32[1,768], index: 17, kind: input, shape index: {}]
  %s18 = inlined_call_operand.hbm [shape: f32[768,256], index: 18, kind: input, shape index: {}]
  %s19 = inlined_call_operand.vmem [shape: f32[1,256], index: 19, kind: input, shape index: {}]
  %s20 = inlined_call_operand.hbm [shape: f32[256,256], index: 20, kind: input, shape index: {}]
  %s21 = inlined_call_operand.vmem [shape: f32[2,256], index: 21, kind: output, shape index: {0}]
  %s22 = inlined_call_operand.hbm [shape: f32[2,128], index: 22, kind: output, shape index: {1}]
  %s23 = inlined_call_operand.hbm [shape: f32[2,128], index: 23, kind: output, shape index: {2}]
  %s24 = inlined_call_operand.hbm [shape: f32[2,128], index: 24, kind: output, shape index: {3}]
  %25 = xla_tuple %s21, %s22, %s23, %s24
  %s26 = sld [smem:[#allocation0]]
  $region158: #{vae_forward.1} parent=0
    _
  %s28 = ssub.s32 1, %s26
  %s29 = scalar_select 0, %s28, %s26
  $region1: #{vae_forward.1} parent=0
    #allocation2 [shape = 'u8[262144]{0}', space=vmem, size = 0x40000, scoped, tag = 'input window, operand 2, single buffered']
    #allocation3 [shape = 's32[1]{0}', space=sflag, size = 0x4, scoped, tag = 'scoped memory for vae_forward.1']
    #allocation4 [shape = 's32[1]{0}', space=sflag, size = 0x4, scoped, tag = 'scoped memory for vae_forward.1']
    #allocation5 [shape = 'u8[131072]{0}', space=vmem, size = 0x20000, scoped, tag = 'input window, operand 4, single buffered']
    #allocation6 [shape = 's32[1]{0}', space=sflag, size = 0x4, scoped, tag = 'scoped memory for vae_forward.1']
    #allocation7 [shape = 'u8[65536]{0}', space=vmem, size = 0x10000, scoped, tag = 'input window, operand 6, single buffered']
    #allocation8 [shape = 'u8[65536]{0}', space=vmem, size = 0x10000, scoped, tag = 'input window, operand 8, single buffered']
    #allocation9 [shape = 's32[1]{0}', space=sflag, size = 0x4, scoped, tag = 'scoped memory for vae_forward.1']
    #allocation10 [shape = 'u8[65536]{0}', space=vmem, size = 0x10000, scoped, tag = 'input window, operand 10, single buffered']
    #allocation11 [shape = 'u8[131072]{0}', space=vmem, size = 0x20000, scoped, tag = 'input window, operand 12, single buffered']
    #allocation12 [shape = 's32[1]{0}', space=sflag, size = 0x4, scoped, tag = 'scoped memory for vae_forward.1']
    #allocation13 [shape = 'u8[262144]{0}', space=vmem, size = 0x40000, scoped, tag = 'input window, operand 14, single buffered']
    #allocation14 [shape = 'u8[786432]{0}', space=vmem, size = 0xc0000, scoped, tag = 'input window, operand 16, single buffered']
    #allocation15 [shape = 's32[1]{0}', space=sflag, size = 0x4, scoped, tag = 'scoped memory for vae_forward.1']
    #allocation16 [shape = 'u8[786432]{0}', space=vmem, size = 0xc0000, scoped, tag = 'input window, operand 18, single buffered']
    #allocation17 [shape = 'u8[262144]{0}', space=vmem, size = 0x40000, scoped, tag = 'input window, operand 20, single buffered']
    #allocation18 [shape = 's32[1]{0}', space=sflag, size = 0x4, scoped, tag = 'scoped memory for vae_forward.1']
    #allocation19 [shape = 'u8[1024]{0}', space=vmem, size = 0x400, scoped, tag = 'output window, operand 1, single buffered']
    #allocation20 [shape = 'u8[1024]{0}', space=vmem, size = 0x400, scoped, tag = 'output window, operand 2, single buffered']
    #allocation21 [shape = 's32[1]{0}', space=sflag, size = 0x4, scoped, tag = 'scoped memory for vae_forward.1']
    #allocation22 [shape = 'u8[1024]{0}', space=vmem, size = 0x400, scoped, tag = 'output window, operand 3, single buffered']
    %30 = vsyncpa [#allocation3], 0
    %31 = vsyncpa [#allocation6], 0
    %32 = vsyncpa [#allocation9], 0
    %33 = vsyncpa [#allocation12], 0
    %34 = vsyncpa [#allocation15], 0
    %35 = vsyncpa [#allocation18], 0
    %36 = vsyncpa [#allocation4], 0
    %37 = vsyncpa [#allocation21], 0
    // Predicated region
    $region2: #{vae_forward.1} parent=1 // pred_check
      _
    $region3: #{vae_forward.1} parent=1 // pred_check_branch
      %39 = sbr.rel (0) target = $region5
    $region4: #{vae_forward.1} parent=1 // pred_region
      _
    $region5: #{vae_forward.1} parent=1 // pred_fallthru
      _
    // Predicated region
    $region6: #{vae_forward.1} parent=1 // pred_check
      _
    $region7: #{vae_forward.1} parent=1 // pred_check_branch
      %41 = sbr.rel (0) target = $region9
    $region8: #{vae_forward.1} parent=1 // pred_region
      _
    $region9: #{vae_forward.1} parent=1 // pred_fallthru
      _
    // Predicated region
    $region10: #{vae_forward.1} parent=1 // pred_check
      _
    $region11: #{vae_forward.1} parent=1 // pred_check_branch
      %43 = sbr.rel (0) target = $region13
    $region12: #{vae_forward.1} parent=1 // pred_region
      %s45 = ssub.s32 8192, 8192
      %46 = vsyncadd [#allocation3], %s45
      %s47 = sshll.u32 [#allocation2], 4
      %s48 = int_to_ptr.vmem [resolvable:$true] %s47
      %53 = dma.hbm_to_vmem [thread:$0]  %s2, 8192, %s48, [#allocation3], 256, 256, 16
    $region13: #{vae_forward.1} parent=1 // pred_fallthru
      _
    // Predicated region
    $region14: #{vae_forward.1} parent=1 // pred_check
      _
    $region15: #{vae_forward.1} parent=1 // pred_check_branch
      %55 = sbr.rel (0) target = $region17
    $region16: #{vae_forward.1} parent=1 // pred_region
      _
    $region17: #{vae_forward.1} parent=1 // pred_fallthru
      _
    // Predicated region
    $region18: #{vae_forward.1} parent=1 // pred_check
      _
    $region19: #{vae_forward.1} parent=1 // pred_check_branch
      %57 = sbr.rel (0) target = $region21
    $region20: #{vae_forward.1} parent=1 // pred_region
      %s59 = ssub.s32 4096, 4096
      %60 = vsyncadd [#allocation6], %s59
      %s61 = sshll.u32 [#allocation5], 4
      %s62 = int_to_ptr.vmem [resolvable:$true] %s61
      %67 = dma.hbm_to_vmem [thread:$0]  %s4, 4096, %s62, [#allocation6], 128, 128, 8
    $region21: #{vae_forward.1} parent=1 // pred_fallthru
      _
    // Predicated region
    $region22: #{vae_forward.1} parent=1 // pred_check
      _
    $region23: #{vae_forward.1} parent=1 // pred_check_branch
      %69 = sbr.rel (0) target = $region25
    $region24: #{vae_forward.1} parent=1 // pred_region
      _
    $region25: #{vae_forward.1} parent=1 // pred_fallthru
      _
    // Predicated region
    $region26: #{vae_forward.1} parent=1 // pred_check
      _
    $region27: #{vae_forward.1} parent=1 // pred_check_branch
      %71 = sbr.rel (0) target = $region29
    $region28: #{vae_forward.1} parent=1 // pred_region
      %s73 = ssub.s32 2048, 2048
      %74 = vsyncadd [#allocation6], %s73
      %s75 = sshll.u32 [#allocation7], 4
      %s76 = int_to_ptr.vmem [resolvable:$true] %s75
      %81 = dma.hbm_to_vmem [thread:$0]  %s6, 2048, %s76, [#allocation6], 128, 128, 8
    $region29: #{vae_forward.1} parent=1 // pred_fallthru
      _
    // Predicated region
    $region30: #{vae_forward.1} parent=1 // pred_check
      _
    $region31: #{vae_forward.1} parent=1 // pred_check_branch
      %83 = sbr.rel (0) target = $region33
    $region32: #{vae_forward.1} parent=1 // pred_region
      _
    $region33: #{vae_forward.1} parent=1 // pred_fallthru
      _
    // Predicated region
    $region34: #{vae_forward.1} parent=1 // pred_check
      _
    $region35: #{vae_forward.1} parent=1 // pred_check_branch
      %85 = sbr.rel (0) target = $region37
    $region36: #{vae_forward.1} parent=1 // pred_region
      %s87 = ssub.s32 2048, 2048
      %88 = vsyncadd [#allocation9], %s87
      %s89 = sshll.u32 [#allocation8], 4
      %s90 = int_to_ptr.vmem [resolvable:$true] %s89
      %95 = dma.hbm_to_vmem [thread:$0]  %s8, 2048, %s90, [#allocation9], 128, 128, 8
    $region37: #{vae_forward.1} parent=1 // pred_fallthru
      _
    // Predicated region
    $region38: #{vae_forward.1} parent=1 // pred_check
      _
    $region39: #{vae_forward.1} parent=1 // pred_check_branch
      %97 = sbr.rel (0) target = $region41
    $region40: #{vae_forward.1} parent=1 // pred_region
      _
    $region41: #{vae_forward.1} parent=1 // pred_fallthru
      _
    // Predicated region
    $region42: #{vae_forward.1} parent=1 // pred_check
      _
    $region43: #{vae_forward.1} parent=1 // pred_check_branch
      %99 = sbr.rel (0) target = $region45
    $region44: #{vae_forward.1} parent=1 // pred_region
      %s101 = ssub.s32 2048, 2048
      %102 = vsyncadd [#allocation9], %s101
      %s103 = sshll.u32 [#allocation10], 4
      %s104 = int_to_ptr.vmem [resolvable:$true] %s103
      %109 = dma.hbm_to_vmem [thread:$0]  %s10, 2048, %s104, [#allocation9], 128, 128, 8
    $region45: #{vae_forward.1} parent=1 // pred_fallthru
      _
    // Predicated region
    $region46: #{vae_forward.1} parent=1 // pred_check
      _
    $region47: #{vae_forward.1} parent=1 // pred_check_branch
      %111 = sbr.rel (0) target = $region49
    $region48: #{vae_forward.1} parent=1 // pred_region
      _
    $region49: #{vae_forward.1} parent=1 // pred_fallthru
      _
    // Predicated region
    $region50: #{vae_forward.1} parent=1 // pred_check
      _
    $region51: #{vae_forward.1} parent=1 // pred_check_branch
      %113 = sbr.rel (0) target = $region53
    $region52: #{vae_forward.1} parent=1 // pred_region
      %s115 = ssub.s32 4096, 4096
      %116 = vsyncadd [#allocation12], %s115
      %s117 = sshll.u32 [#allocation11], 4
      %s118 = int_to_ptr.vmem [resolvable:$true] %s117
      %123 = dma.hbm_to_vmem [thread:$0]  %s12, 4096, %s118, [#allocation12], 256, 256, 16
    $region53: #{vae_forward.1} parent=1 // pred_fallthru
      _
    // Predicated region
    $region54: #{vae_forward.1} parent=1 // pred_check
      _
    $region55: #{vae_forward.1} parent=1 // pred_check_branch
      %125 = sbr.rel (0) target = $region57
    $region56: #{vae_forward.1} parent=1 // pred_region
      _
    $region57: #{vae_forward.1} parent=1 // pred_fallthru
      _
    // Predicated region
    $region58: #{vae_forward.1} parent=1 // pred_check
      _
    $region59: #{vae_forward.1} parent=1 // pred_check_branch
      %127 = sbr.rel (0) target = $region61
    $region60: #{vae_forward.1} parent=1 // pred_region
      %s129 = ssub.s32 8192, 8192
      %130 = vsyncadd [#allocation12], %s129
      %s131 = sshll.u32 [#allocation13], 4
      %s132 = int_to_ptr.vmem [resolvable:$true] %s131
      %137 = dma.hbm_to_vmem [thread:$0]  %s14, 8192, %s132, [#allocation12], 256, 256, 16
    $region61: #{vae_forward.1} parent=1 // pred_fallthru
      _
    // Predicated region
    $region62: #{vae_forward.1} parent=1 // pred_check
      _
    $region63: #{vae_forward.1} parent=1 // pred_check_branch
      %139 = sbr.rel (0) target = $region65
    $region64: #{vae_forward.1} parent=1 // pred_region
      _
    $region65: #{vae_forward.1} parent=1 // pred_fallthru
      _
    // Predicated region
    $region66: #{vae_forward.1} parent=1 // pred_check
      _
    $region67: #{vae_forward.1} parent=1 // pred_check_branch
      %141 = sbr.rel (0) target = $region69
    $region68: #{vae_forward.1} parent=1 // pred_region
      %s143 = ssub.s32 24576, 24576
      %144 = vsyncadd [#allocation15], %s143
      %s145 = sshll.u32 [#allocation14], 4
      %s146 = int_to_ptr.vmem [resolvable:$true] %s145
      %151 = dma.hbm_to_vmem [thread:$0]  %s16, 24576, %s146, [#allocation15], 768, 768, 48
    $region69: #{vae_forward.1} parent=1 // pred_fallthru
      _
    // Predicated region
    $region70: #{vae_forward.1} parent=1 // pred_check
      _
    $region71: #{vae_forward.1} parent=1 // pred_check_branch
      %153 = sbr.rel (0) target = $region73
    $region72: #{vae_forward.1} parent=1 // pred_region
      _
    $region73: #{vae_forward.1} parent=1 // pred_fallthru
      _
    // Predicated region
    $region74: #{vae_forward.1} parent=1 // pred_check
      _
    $region75: #{vae_forward.1} parent=1 // pred_check_branch
      %155 = sbr.rel (0) target = $region77
    $region76: #{vae_forward.1} parent=1 // pred_region
      %s157 = ssub.s32 24576, 24576
      %158 = vsyncadd [#allocation15], %s157
      %s159 = sshll.u32 [#allocation16], 4
      %s160 = int_to_ptr.vmem [resolvable:$true] %s159
      %165 = dma.hbm_to_vmem [thread:$0]  %s18, 24576, %s160, [#allocation15], 256, 256, 16
    $region77: #{vae_forward.1} parent=1 // pred_fallthru
      _
    // Predicated region
    $region78: #{vae_forward.1} parent=1 // pred_check
      _
    $region79: #{vae_forward.1} parent=1 // pred_check_branch
      %167 = sbr.rel (0) target = $region81
    $region80: #{vae_forward.1} parent=1 // pred_region
      _
    $region81: #{vae_forward.1} parent=1 // pred_fallthru
      _
    // Predicated region
    $region82: #{vae_forward.1} parent=1 // pred_check
      _
    $region83: #{vae_forward.1} parent=1 // pred_check_branch
      %169 = sbr.rel (0) target = $region85
    $region84: #{vae_forward.1} parent=1 // pred_region
      %s171 = ssub.s32 8192, 8192
      %172 = vsyncadd [#allocation18], %s171
      %s173 = sshll.u32 [#allocation17], 4
      %s174 = int_to_ptr.vmem [resolvable:$true] %s173
      %179 = dma.hbm_to_vmem [thread:$0]  %s20, 8192, %s174, [#allocation18], 256, 256, 16
    $region85: #{vae_forward.1} parent=1 // pred_fallthru
      _
    // Predicated region
    $region86: #{vae_forward.1} parent=1 // pred_check
      _
    $region87: #{vae_forward.1} parent=1 // pred_check_branch
      %181 = sbr.rel (0) target = $region89
    $region88: #{vae_forward.1} parent=1 // pred_region
      %182 = dma.done [#allocation3], 8192
    $region89: #{vae_forward.1} parent=1 // pred_fallthru
      _
    // Predicated region
    $region90: #{vae_forward.1} parent=1 // pred_check
      _
    $region91: #{vae_forward.1} parent=1 // pred_check_branch
      %184 = sbr.rel (0) target = $region93
    $region92: #{vae_forward.1} parent=1 // pred_region
      %185 = dma.done [#allocation6], 4096
    $region93: #{vae_forward.1} parent=1 // pred_fallthru
      _
    // Predicated region
    $region94: #{vae_forward.1} parent=1 // pred_check
      _
    $region95: #{vae_forward.1} parent=1 // pred_check_branch
      %187 = sbr.rel (0) target = $region97
    $region96: #{vae_forward.1} parent=1 // pred_region
      %188 = dma.done [#allocation6], 2048
    $region97: #{vae_forward.1} parent=1 // pred_fallthru
      _
    // Predicated region
    $region98: #{vae_forward.1} parent=1 // pred_check
      _
    $region99: #{vae_forward.1} parent=1 // pred_check_branch
      %190 = sbr.rel (0) target = $region101
    $region100: #{vae_forward.1} parent=1 // pred_region
      %191 = dma.done [#allocation9], 2048
    $region101: #{vae_forward.1} parent=1 // pred_fallthru
      _
    // Predicated region
    $region102: #{vae_forward.1} parent=1 // pred_check
      _
    $region103: #{vae_forward.1} parent=1 // pred_check_branch
      %193 = sbr.rel (0) target = $region105
    $region104: #{vae_forward.1} parent=1 // pred_region
      %194 = dma.done [#allocation9], 2048
    $region105: #{vae_forward.1} parent=1 // pred_fallthru
      _
    // Predicated region
    $region106: #{vae_forward.1} parent=1 // pred_check
      _
    $region107: #{vae_forward.1} parent=1 // pred_check_branch
      %196 = sbr.rel (0) target = $region109
    $region108: #{vae_forward.1} parent=1 // pred_region
      %197 = dma.done [#allocation12], 4096
    $region109: #{vae_forward.1} parent=1 // pred_fallthru
      _
    // Predicated region
    $region110: #{vae_forward.1} parent=1 // pred_check
      _
    $region111: #{vae_forward.1} parent=1 // pred_check_branch
      %199 = sbr.rel (0) target = $region113
    $region112: #{vae_forward.1} parent=1 // pred_region
      %200 = dma.done [#allocation12], 8192
    $region113: #{vae_forward.1} parent=1 // pred_fallthru
      _
    // Predicated region
    $region114: #{vae_forward.1} parent=1 // pred_check
      _
    $region115: #{vae_forward.1} parent=1 // pred_check_branch
      %202 = sbr.rel (0) target = $region117
    $region116: #{vae_forward.1} parent=1 // pred_region
      %203 = dma.done [#allocation15], 24576
    $region117: #{vae_forward.1} parent=1 // pred_fallthru
      _
    // Predicated region
    $region118: #{vae_forward.1} parent=1 // pred_check
      _
    $region119: #{vae_forward.1} parent=1 // pred_check_branch
      %205 = sbr.rel (0) target = $region121
    $region120: #{vae_forward.1} parent=1 // pred_region
      %206 = dma.done [#allocation15], 24576
    $region121: #{vae_forward.1} parent=1 // pred_fallthru
      _
    // Predicated region
    $region122: #{vae_forward.1} parent=1 // pred_check
      _
    $region123: #{vae_forward.1} parent=1 // pred_check_branch
      %208 = sbr.rel (0) target = $region125
    $region124: #{vae_forward.1} parent=1 // pred_region
      %209 = dma.done [#allocation18], 8192
    $region125: #{vae_forward.1} parent=1 // pred_fallthru
      _
    %v210 = vld [vmem:[%s0] sm:$0xf]
    %v211 = vld [vmem:[#allocation2] sm:$0xff]
    %v212 = vld [vmem:[#allocation2 + $0x8] sm:$0xff]
    %v213 = vld [vmem:[#allocation2 + $0x10] sm:$0xff]
    %v214 = vld [vmem:[#allocation2 + $0x18] sm:$0xff]
    %v215 = vld [vmem:[#allocation2 + $0x20] sm:$0xff]
    %v216 = vld [vmem:[#allocation2 + $0x28] sm:$0xff]
    %v217 = vld [vmem:[#allocation2 + $0x30] sm:$0xff]
    %v218 = vld [vmem:[#allocation2 + $0x38] sm:$0xff]
    %v219 = vld [vmem:[#allocation2 + $0x40] sm:$0xff]
    %v220 = vld [vmem:[#allocation2 + $0x48] sm:$0xff]
    %v221 = vld [vmem:[#allocation2 + $0x50] sm:$0xff]
    %v222 = vld [vmem:[#allocation2 + $0x58] sm:$0xff]
    %v223 = vld [vmem:[#allocation2 + $0x60] sm:$0xff]
    %v224 = vld [vmem:[#allocation2 + $0x68] sm:$0xff]
    %v225 = vld [vmem:[#allocation2 + $0x70] sm:$0xff]
    %v226 = vld [vmem:[#allocation2 + $0x78] sm:$0xff]
    %v227 = vld [vmem:[#allocation2 + $0x80] sm:$0xff]
    %v228 = vld [vmem:[#allocation2 + $0x88] sm:$0xff]
    %v229 = vld [vmem:[#allocation2 + $0x90] sm:$0xff]
    %v230 = vld [vmem:[#allocation2 + $0x98] sm:$0xff]
    %v231 = vld [vmem:[#allocation2 + $0xa0] sm:$0xff]
    %v232 = vld [vmem:[#allocation2 + $0xa8] sm:$0xff]
    %v233 = vld [vmem:[#allocation2 + $0xb0] sm:$0xff]
    %v234 = vld [vmem:[#allocation2 + $0xb8] sm:$0xff]
    %v235 = vld [vmem:[#allocation2 + $0xc0] sm:$0xff]
    %v236 = vld [vmem:[#allocation2 + $0xc8] sm:$0xff]
    %v237 = vld [vmem:[#allocation2 + $0xd0] sm:$0xff]
    %v238 = vld [vmem:[#allocation2 + $0xd8] sm:$0xff]
    %v239 = vld [vmem:[#allocation2 + $0xe0] sm:$0xff]
    %v240 = vld [vmem:[#allocation2 + $0xe8] sm:$0xff]
    %v241 = vld [vmem:[#allocation2 + $0xf0] sm:$0xff]
    %v242 = vld [vmem:[#allocation2 + $0xf8] sm:$0xff]
    %v243 = vld [vmem:[#allocation2 + $0x100] sm:$0xff]
    %v244 = vld [vmem:[#allocation2 + $0x108] sm:$0xff]
    %v245 = vld [vmem:[#allocation2 + $0x110] sm:$0xff]
    %v246 = vld [vmem:[#allocation2 + $0x118] sm:$0xff]
    %v247 = vld [vmem:[#allocation2 + $0x120] sm:$0xff]
    %v248 = vld [vmem:[#allocation2 + $0x128] sm:$0xff]
    %v249 = vld [vmem:[#allocation2 + $0x130] sm:$0xff]
    %v250 = vld [vmem:[#allocation2 + $0x138] sm:$0xff]
    %v251 = vld [vmem:[#allocation2 + $0x140] sm:$0xff]
    %v252 = vld [vmem:[#allocation2 + $0x148] sm:$0xff]
    %v253 = vld [vmem:[#allocation2 + $0x150] sm:$0xff]
    %v254 = vld [vmem:[#allocation2 + $0x158] sm:$0xff]
    %v255 = vld [vmem:[#allocation2 + $0x160] sm:$0xff]
    %v256 = vld [vmem:[#allocation2 + $0x168] sm:$0xff]
    %v257 = vld [vmem:[#allocation2 + $0x170] sm:$0xff]
    %v258 = vld [vmem:[#allocation2 + $0x178] sm:$0xff]
    %v259 = vld [vmem:[#allocation2 + $0x180] sm:$0xff]
    %v260 = vld [vmem:[#allocation2 + $0x188] sm:$0xff]
    %v261 = vld [vmem:[#allocation2 + $0x190] sm:$0xff]
    %v262 = vld [vmem:[#allocation2 + $0x198] sm:$0xff]
    %v263 = vld [vmem:[#allocation2 + $0x1a0] sm:$0xff]
    %v264 = vld [vmem:[#allocation2 + $0x1a8] sm:$0xff]
    %v265 = vld [vmem:[#allocation2 + $0x1b0] sm:$0xff]
    %v266 = vld [vmem:[#allocation2 + $0x1b8] sm:$0xff]
    %v267 = vld [vmem:[#allocation2 + $0x1c0] sm:$0xff]
    %v268 = vld [vmem:[#allocation2 + $0x1c8] sm:$0xff]
    %v269 = vld [vmem:[#allocation2 + $0x1d0] sm:$0xff]
    %v270 = vld [vmem:[#allocation2 + $0x1d8] sm:$0xff]
    %v271 = vld [vmem:[#allocation2 + $0x1e0] sm:$0xff]
    %v272 = vld [vmem:[#allocation2 + $0x1e8] sm:$0xff]
    %v273 = vld [vmem:[#allocation2 + $0x1f0] sm:$0xff]
    %v274 = vld [vmem:[#allocation2 + $0x1f8] sm:$0xff]
    %v275 = vld [vmem:[%s3] sm:$0x3]
    %v277 = vlaneseq
    %v278 = vshrl.u32 %v277, 7
    %v279 = vsub.s32 0, %v278
    %v280 = vrot.slane %v275, %v279
    %v281 = vlaneseq
    %v282 = vshrl.u32 %v281, 7
    %v283 = vsub.s32 1, %v282
    %v284 = vrot.slane %v275, %v283
    %v289 = vunpack.c.l.s4 1983009808
    %v290 = vunpack.c.0.s8 %v289
    %v291 = vlaneseq
    %v292 = vshrl.u32 %v291, 7
    %v293 = vsub.s32 %v290, %v292
    %v294 = vrot.slane %v210, %v293
    %v295 = vcombine.high %v294, %v294
    %298 = vmatprep.subr.mxu0 %v212
    %299 = vmatpush1.msra.mxu0 %v211
    %300 = vmatprep.subr.mxu0 %v214
    %301 = vmatpush1.msra.mxu0 %v213
    %302 = vmatprep.subr.mxu0 %v216
    %303 = vmatpush1.msra.mxu0 %v215
    %304 = vmatprep.subr.mxu0 %v218
    %305 = vmatpush1.msra.mxu0 %v217
    %306 = vmatprep.subr.mxu0 %v220
    %307 = vmatpush1.msra.mxu0 %v219
    %308 = vmatprep.subr.mxu0 %v222
    %309 = vmatpush1.msra.mxu0 %v221
    %310 = vmatprep.subr.mxu0 %v224
    %311 = vmatpush1.msra.mxu0 %v223
    %312 = vmatprep.subr.mxu0 %v226
    %313 = vmatpush1.msra.mxu0 %v225
    %314 = vmatprep.subr.mxu0 %v228
    %315 = vmatpush1.msra.mxu0 %v227
    %316 = vmatprep.subr.mxu0 %v230
    %317 = vmatpush1.msra.mxu0 %v229
    %318 = vmatprep.subr.mxu0 %v232
    %319 = vmatpush1.msra.mxu0 %v231
    %320 = vmatprep.subr.mxu0 %v234
    %321 = vmatpush1.msra.mxu0 %v233
    %322 = vmatprep.subr.mxu0 %v236
    %323 = vmatpush1.msra.mxu0 %v235
    %324 = vmatprep.subr.mxu0 %v238
    %325 = vmatpush1.msra.mxu0 %v237
    %326 = vmatprep.subr.mxu0 %v240
    %327 = vmatpush1.msra.mxu0 %v239
    %328 = vmatprep.subr.mxu0 %v242
    %329 = vmatpush1.msra.mxu0 %v241
    %330 = vmatprep.subr.mxu0 %v244
    %331 = vmatpush1.msra.mxu0 %v243
    %332 = vmatprep.subr.mxu0 %v246
    %333 = vmatpush1.msra.mxu0 %v245
    %334 = vmatprep.subr.mxu0 %v248
    %335 = vmatpush1.msra.mxu0 %v247
    %336 = vmatprep.subr.mxu0 %v250
    %337 = vmatpush1.msra.mxu0 %v249
    %338 = vmatprep.subr.mxu0 %v252
    %339 = vmatpush1.msra.mxu0 %v251
    %340 = vmatprep.subr.mxu0 %v254
    %341 = vmatpush1.msra.mxu0 %v253
    %342 = vmatprep.subr.mxu0 %v256
    %343 = vmatpush1.msra.mxu0 %v255
    %344 = vmatprep.subr.mxu0 %v258
    %345 = vmatpush1.msra.mxu0 %v257
    %346 = vmatprep.subr.mxu0 %v260
    %347 = vmatpush1.msra.mxu0 %v259
    %348 = vmatprep.subr.mxu0 %v262
    %349 = vmatpush1.msra.mxu0 %v261
    %350 = vmatprep.subr.mxu0 %v264
    %351 = vmatpush1.msra.mxu0 %v263
    %352 = vmatprep.subr.mxu0 %v266
    %353 = vmatpush1.msra.mxu0 %v265
    %354 = vmatprep.subr.mxu0 %v268
    %355 = vmatpush1.msra.mxu0 %v267
    %356 = vmatprep.subr.mxu0 %v270
    %357 = vmatpush1.msra.mxu0 %v269
    %358 = vmatprep.subr.mxu0 %v272
    %359 = vmatpush1.msra.mxu0 %v271
    %360 = vmatprep.subr.mxu0 %v274
    %361 = vmatpush1.msra.mxu0 %v273
    %362 = vmatprep.mubr.f32.mxu0 %v295
    %363 = vmatmul.mubr.f32.gmra.mrb[0].mxu0 %v294
    %v364 = vpop.f32.mrb[0].mxu0
    %v365 = vadd.f32 %v280, %v364
    %v366 = vpop.f32.mrb[0].mxu0
    %v367 = vadd.f32 %v284, %v366
    %368 = vdwg.mxu0
    %v369 = vmax.f32 %v365, 0.0
    %v370 = vmax.f32 %v367, 0.0
    %v371 = vld [vmem:[#allocation5] sm:$0xff]
    %v372 = vld [vmem:[#allocation5 + $0x8] sm:$0xff]
    %v373 = vld [vmem:[#allocation5 + $0x10] sm:$0xff]
    %v374 = vld [vmem:[#allocation5 + $0x18] sm:$0xff]
    %v375 = vld [vmem:[#allocation5 + $0x20] sm:$0xff]
    %v376 = vld [vmem:[#allocation5 + $0x28] sm:$0xff]
    %v377 = vld [vmem:[#allocation5 + $0x30] sm:$0xff]
    %v378 = vld [vmem:[#allocation5 + $0x38] sm:$0xff]
    %v379 = vld [vmem:[#allocation5 + $0x40] sm:$0xff]
    %v380 = vld [vmem:[#allocation5 + $0x48] sm:$0xff]
    %v381 = vld [vmem:[#allocation5 + $0x50] sm:$0xff]
    %v382 = vld [vmem:[#allocation5 + $0x58] sm:$0xff]
    %v383 = vld [vmem:[#allocation5 + $0x60] sm:$0xff]
    %v384 = vld [vmem:[#allocation5 + $0x68] sm:$0xff]
    %v385 = vld [vmem:[#allocation5 + $0x70] sm:$0xff]
    %v386 = vld [vmem:[#allocation5 + $0x78] sm:$0xff]
    %v387 = vld [vmem:[#allocation5 + $0x80] sm:$0xff]
    %v388 = vld [vmem:[#allocation5 + $0x88] sm:$0xff]
    %v389 = vld [vmem:[#allocation5 + $0x90] sm:$0xff]
    %v390 = vld [vmem:[#allocation5 + $0x98] sm:$0xff]
    %v391 = vld [vmem:[#allocation5 + $0xa0] sm:$0xff]
    %v392 = vld [vmem:[#allocation5 + $0xa8] sm:$0xff]
    %v393 = vld [vmem:[#allocation5 + $0xb0] sm:$0xff]
    %v394 = vld [vmem:[#allocation5 + $0xb8] sm:$0xff]
    %v395 = vld [vmem:[#allocation5 + $0xc0] sm:$0xff]
    %v396 = vld [vmem:[#allocation5 + $0xc8] sm:$0xff]
    %v397 = vld [vmem:[#allocation5 + $0xd0] sm:$0xff]
    %v398 = vld [vmem:[#allocation5 + $0xd8] sm:$0xff]
    %v399 = vld [vmem:[#allocation5 + $0xe0] sm:$0xff]
    %v400 = vld [vmem:[#allocation5 + $0xe8] sm:$0xff]
    %v401 = vld [vmem:[#allocation5 + $0xf0] sm:$0xff]
    %v402 = vld [vmem:[#allocation5 + $0xf8] sm:$0xff]
    %v403 = vld [vmem:[%s5] sm:$0x1]
    %v405 = vlaneseq
    %v406 = vshrl.u32 %v405, 7
    %v407 = vsub.s32 0, %v406
    %v408 = vrot.slane %v403, %v407
    %410 = vmatprep.subr.mxu0 0.0
    %411 = vmatpush1.msra.mxu0 %v371
    %412 = vmatprep.subr.mxu0 0.0
    %413 = vmatpush1.msra.mxu0 %v372
    %414 = vmatprep.subr.mxu0 0.0
    %415 = vmatpush1.msra.mxu0 %v373
    %416 = vmatprep.subr.mxu0 0.0
    %417 = vmatpush1.msra.mxu0 %v374
    %418 = vmatprep.subr.mxu0 0.0
    %419 = vmatpush1.msra.mxu0 %v375
    %420 = vmatprep.subr.mxu0 0.0
    %421 = vmatpush1.msra.mxu0 %v376
    %422 = vmatprep.subr.mxu0 0.0
    %423 = vmatpush1.msra.mxu0 %v377
    %424 = vmatprep.subr.mxu0 0.0
    %425 = vmatpush1.msra.mxu0 %v378
    %426 = vmatprep.subr.mxu0 0.0
    %427 = vmatpush1.msra.mxu0 %v379
    %428 = vmatprep.subr.mxu0 0.0
    %429 = vmatpush1.msra.mxu0 %v380
    %430 = vmatprep.subr.mxu0 0.0
    %431 = vmatpush1.msra.mxu0 %v381
    %432 = vmatprep.subr.mxu0 0.0
    %433 = vmatpush1.msra.mxu0 %v382
    %434 = vmatprep.subr.mxu0 0.0
    %435 = vmatpush1.msra.mxu0 %v383
    %436 = vmatprep.subr.mxu0 0.0
    %437 = vmatpush1.msra.mxu0 %v384
    %438 = vmatprep.subr.mxu0 0.0
    %439 = vmatpush1.msra.mxu0 %v385
    %440 = vmatprep.subr.mxu0 0.0
    %441 = vmatpush1.msra.mxu0 %v386
    %442 = vmatprep.subr.mxu0 0.0
    %443 = vmatpush1.msra.mxu0 %v387
    %444 = vmatprep.subr.mxu0 0.0
    %445 = vmatpush1.msra.mxu0 %v388
    %446 = vmatprep.subr.mxu0 0.0
    %447 = vmatpush1.msra.mxu0 %v389
    %448 = vmatprep.subr.mxu0 0.0
    %449 = vmatpush1.msra.mxu0 %v390
    %450 = vmatprep.subr.mxu0 0.0
    %451 = vmatpush1.msra.mxu0 %v391
    %452 = vmatprep.subr.mxu0 0.0
    %453 = vmatpush1.msra.mxu0 %v392
    %454 = vmatprep.subr.mxu0 0.0
    %455 = vmatpush1.msra.mxu0 %v393
    %456 = vmatprep.subr.mxu0 0.0
    %457 = vmatpush1.msra.mxu0 %v394
    %458 = vmatprep.subr.mxu0 0.0
    %459 = vmatpush1.msra.mxu0 %v395
    %460 = vmatprep.subr.mxu0 0.0
    %461 = vmatpush1.msra.mxu0 %v396
    %462 = vmatprep.subr.mxu0 0.0
    %463 = vmatpush1.msra.mxu0 %v397
    %464 = vmatprep.subr.mxu0 0.0
    %465 = vmatpush1.msra.mxu0 %v398
    %466 = vmatprep.subr.mxu0 0.0
    %467 = vmatpush1.msra.mxu0 %v399
    %468 = vmatprep.subr.mxu0 0.0
    %469 = vmatpush1.msra.mxu0 %v400
    %470 = vmatprep.subr.mxu0 0.0
    %471 = vmatpush1.msra.mxu0 %v401
    %472 = vmatprep.subr.mxu0 0.0
    %473 = vmatpush1.msra.mxu0 %v402
    %474 = vmatprep.mubr.f32.mxu0 %v370
    %475 = vmatmul.mubr.f32.gmra.mrb[0].mxu0 %v369
    %v476 = vpop.f32.mrb[0].mxu0
    %v477 = vadd.f32 %v408, %v476
    %v478 = vpop.f32.mrb[0].mxu0
    %479 = vdwg.mxu0
    %v480 = vmax.f32 %v477, 0.0
    %v481 = vld [vmem:[#allocation7] sm:$0xff]
    %v482 = vld [vmem:[#allocation7 + $0x8] sm:$0xff]
    %v483 = vld [vmem:[#allocation7 + $0x10] sm:$0xff]
    %v484 = vld [vmem:[#allocation7 + $0x18] sm:$0xff]
    %v485 = vld [vmem:[#allocation7 + $0x20] sm:$0xff]
    %v486 = vld [vmem:[#allocation7 + $0x28] sm:$0xff]
    %v487 = vld [vmem:[#allocation7 + $0x30] sm:$0xff]
    %v488 = vld [vmem:[#allocation7 + $0x38] sm:$0xff]
    %v489 = vld [vmem:[#allocation7 + $0x40] sm:$0xff]
    %v490 = vld [vmem:[#allocation7 + $0x48] sm:$0xff]
    %v491 = vld [vmem:[#allocation7 + $0x50] sm:$0xff]
    %v492 = vld [vmem:[#allocation7 + $0x58] sm:$0xff]
    %v493 = vld [vmem:[#allocation7 + $0x60] sm:$0xff]
    %v494 = vld [vmem:[#allocation7 + $0x68] sm:$0xff]
    %v495 = vld [vmem:[#allocation7 + $0x70] sm:$0xff]
    %v496 = vld [vmem:[#allocation7 + $0x78] sm:$0xff]
    %v497 = vld [vmem:[%s7] sm:$0x1]
    %v499 = vlaneseq
    %v500 = vshrl.u32 %v499, 7
    %v501 = vsub.s32 0, %v500
    %v502 = vrot.slane %v497, %v501
    %504 = vmatprep.subr.mxu0 0.0
    %505 = vmatpush1.msra.mxu0 %v481
    %506 = vmatprep.subr.mxu0 0.0
    %507 = vmatpush1.msra.mxu0 %v482
    %508 = vmatprep.subr.mxu0 0.0
    %509 = vmatpush1.msra.mxu0 %v483
    %510 = vmatprep.subr.mxu0 0.0
    %511 = vmatpush1.msra.mxu0 %v484
    %512 = vmatprep.subr.mxu0 0.0
    %513 = vmatpush1.msra.mxu0 %v485
    %514 = vmatprep.subr.mxu0 0.0
    %515 = vmatpush1.msra.mxu0 %v486
    %516 = vmatprep.subr.mxu0 0.0
    %517 = vmatpush1.msra.mxu0 %v487
    %518 = vmatprep.subr.mxu0 0.0
    %519 = vmatpush1.msra.mxu0 %v488
    %520 = vmatprep.subr.mxu0 0.0
    %521 = vmatpush1.msra.mxu0 %v489
    %522 = vmatprep.subr.mxu0 0.0
    %523 = vmatpush1.msra.mxu0 %v490
    %524 = vmatprep.subr.mxu0 0.0
    %525 = vmatpush1.msra.mxu0 %v491
    %526 = vmatprep.subr.mxu0 0.0
    %527 = vmatpush1.msra.mxu0 %v492
    %528 = vmatprep.subr.mxu0 0.0
    %529 = vmatpush1.msra.mxu0 %v493
    %530 = vmatprep.subr.mxu0 0.0
    %531 = vmatpush1.msra.mxu0 %v494
    %532 = vmatprep.subr.mxu0 0.0
    %533 = vmatpush1.msra.mxu0 %v495
    %534 = vmatprep.subr.mxu0 0.0
    %535 = vmatpush1.msra.mxu0 %v496
    %536 = vmatprep.subr.mxu0 0.0
    %537 = vmatpush1.msra.mxu0 0.0
    %538 = vmatprep.subr.mxu0 0.0
    %539 = vmatpush1.msra.mxu0 0.0
    %540 = vmatprep.subr.mxu0 0.0
    %541 = vmatpush1.msra.mxu0 0.0
    %542 = vmatprep.subr.mxu0 0.0
    %543 = vmatpush1.msra.mxu0 0.0
    %544 = vmatprep.subr.mxu0 0.0
    %545 = vmatpush1.msra.mxu0 0.0
    %546 = vmatprep.subr.mxu0 0.0
    %547 = vmatpush1.msra.mxu0 0.0
    %548 = vmatprep.subr.mxu0 0.0
    %549 = vmatpush1.msra.mxu0 0.0
    %550 = vmatprep.subr.mxu0 0.0
    %551 = vmatpush1.msra.mxu0 0.0
    %552 = vmatprep.subr.mxu0 0.0
    %553 = vmatpush1.msra.mxu0 0.0
    %554 = vmatprep.subr.mxu0 0.0
    %555 = vmatpush1.msra.mxu0 0.0
    %556 = vmatprep.subr.mxu0 0.0
    %557 = vmatpush1.msra.mxu0 0.0
    %558 = vmatprep.subr.mxu0 0.0
    %559 = vmatpush1.msra.mxu0 0.0
    %560 = vmatprep.subr.mxu0 0.0
    %561 = vmatpush1.msra.mxu0 0.0
    %562 = vmatprep.subr.mxu0 0.0
    %563 = vmatpush1.msra.mxu0 0.0
    %564 = vmatprep.subr.mxu0 0.0
    %565 = vmatpush1.msra.mxu0 0.0
    %566 = vmatprep.subr.mxu0 0.0
    %567 = vmatpush1.msra.mxu0 0.0
    %568 = vmatprep.mubr.f32.mxu0 0.0
    %569 = vmatmul.mubr.f32.gmra.mrb[0].mxu0 %v480
    %v570 = vpop.f32.mrb[0].mxu0
    %v571 = vadd.f32 %v502, %v570
    %v572 = vpop.f32.mrb[0].mxu0
    %573 = vdwg.mxu0
    %v574 = vld [vmem:[#allocation8] sm:$0xff]
    %v575 = vld [vmem:[#allocation8 + $0x8] sm:$0xff]
    %v576 = vld [vmem:[#allocation8 + $0x10] sm:$0xff]
    %v577 = vld [vmem:[#allocation8 + $0x18] sm:$0xff]
    %v578 = vld [vmem:[#allocation8 + $0x20] sm:$0xff]
    %v579 = vld [vmem:[#allocation8 + $0x28] sm:$0xff]
    %v580 = vld [vmem:[#allocation8 + $0x30] sm:$0xff]
    %v581 = vld [vmem:[#allocation8 + $0x38] sm:$0xff]
    %v582 = vld [vmem:[#allocation8 + $0x40] sm:$0xff]
    %v583 = vld [vmem:[#allocation8 + $0x48] sm:$0xff]
    %v584 = vld [vmem:[#allocation8 + $0x50] sm:$0xff]
    %v585 = vld [vmem:[#allocation8 + $0x58] sm:$0xff]
    %v586 = vld [vmem:[#allocation8 + $0x60] sm:$0xff]
    %v587 = vld [vmem:[#allocation8 + $0x68] sm:$0xff]
    %v588 = vld [vmem:[#allocation8 + $0x70] sm:$0xff]
    %v589 = vld [vmem:[#allocation8 + $0x78] sm:$0xff]
    %v590 = vld [vmem:[%s9] sm:$0x1]
    %v592 = vlaneseq
    %v593 = vshrl.u32 %v592, 7
    %v594 = vsub.s32 0, %v593
    %v595 = vrot.slane %v590, %v594
    %597 = vmatprep.subr.mxu0 0.0
    %598 = vmatpush1.msra.mxu0 %v574
    %599 = vmatprep.subr.mxu0 0.0
    %600 = vmatpush1.msra.mxu0 %v575
    %601 = vmatprep.subr.mxu0 0.0
    %602 = vmatpush1.msra.mxu0 %v576
    %603 = vmatprep.subr.mxu0 0.0
    %604 = vmatpush1.msra.mxu0 %v577
    %605 = vmatprep.subr.mxu0 0.0
    %606 = vmatpush1.msra.mxu0 %v578
    %607 = vmatprep.subr.mxu0 0.0
    %608 = vmatpush1.msra.mxu0 %v579
    %609 = vmatprep.subr.mxu0 0.0
    %610 = vmatpush1.msra.mxu0 %v580
    %611 = vmatprep.subr.mxu0 0.0
    %612 = vmatpush1.msra.mxu0 %v581
    %613 = vmatprep.subr.mxu0 0.0
    %614 = vmatpush1.msra.mxu0 %v582
    %615 = vmatprep.subr.mxu0 0.0
    %616 = vmatpush1.msra.mxu0 %v583
    %617 = vmatprep.subr.mxu0 0.0
    %618 = vmatpush1.msra.mxu0 %v584
    %619 = vmatprep.subr.mxu0 0.0
    %620 = vmatpush1.msra.mxu0 %v585
    %621 = vmatprep.subr.mxu0 0.0
    %622 = vmatpush1.msra.mxu0 %v586
    %623 = vmatprep.subr.mxu0 0.0
    %624 = vmatpush1.msra.mxu0 %v587
    %625 = vmatprep.subr.mxu0 0.0
    %626 = vmatpush1.msra.mxu0 %v588
    %627 = vmatprep.subr.mxu0 0.0
    %628 = vmatpush1.msra.mxu0 %v589
    %629 = vmatprep.subr.mxu0 0.0
    %630 = vmatpush1.msra.mxu0 0.0
    %631 = vmatprep.subr.mxu0 0.0
    %632 = vmatpush1.msra.mxu0 0.0
    %633 = vmatprep.subr.mxu0 0.0
    %634 = vmatpush1.msra.mxu0 0.0
    %635 = vmatprep.subr.mxu0 0.0
    %636 = vmatpush1.msra.mxu0 0.0
    %637 = vmatprep.subr.mxu0 0.0
    %638 = vmatpush1.msra.mxu0 0.0
    %639 = vmatprep.subr.mxu0 0.0
    %640 = vmatpush1.msra.mxu0 0.0
    %641 = vmatprep.subr.mxu0 0.0
    %642 = vmatpush1.msra.mxu0 0.0
    %643 = vmatprep.subr.mxu0 0.0
    %644 = vmatpush1.msra.mxu0 0.0
    %645 = vmatprep.subr.mxu0 0.0
    %646 = vmatpush1.msra.mxu0 0.0
    %647 = vmatprep.subr.mxu0 0.0
    %648 = vmatpush1.msra.mxu0 0.0
    %649 = vmatprep.subr.mxu0 0.0
    %650 = vmatpush1.msra.mxu0 0.0
    %651 = vmatprep.subr.mxu0 0.0
    %652 = vmatpush1.msra.mxu0 0.0
    %653 = vmatprep.subr.mxu0 0.0
    %654 = vmatpush1.msra.mxu0 0.0
    %655 = vmatprep.subr.mxu0 0.0
    %656 = vmatpush1.msra.mxu0 0.0
    %657 = vmatprep.subr.mxu0 0.0
    %658 = vmatpush1.msra.mxu0 0.0
    %659 = vmatprep.subr.mxu0 0.0
    %660 = vmatpush1.msra.mxu0 0.0
    %661 = vmatprep.mubr.f32.mxu0 0.0
    %662 = vmatmul.mubr.f32.gmra.mrb[0].mxu0 %v480
    %v663 = vpop.f32.mrb[0].mxu0
    %v664 = vadd.f32 %v595, %v663
    %v665 = vpop.f32.mrb[0].mxu0
    %666 = vdwg.mxu0
    %v667 = vld [vmem:[%s1] sm:$0x3]
    %v668 = vmul.f32 %v664, 0.5
    %v669 = vmul.f32 %v668, 1.442695
    %v670 = vpow.pop %v669
    %v671 = vmul.f32 %v667, %v670
    %v672 = vadd.f32 %v571, %v671
    %v673 = vld [vmem:[#allocation10] sm:$0xff]
    %v674 = vld [vmem:[#allocation10 + $0x8] sm:$0xff]
    %v675 = vld [vmem:[#allocation10 + $0x10] sm:$0xff]
    %v676 = vld [vmem:[#allocation10 + $0x18] sm:$0xff]
    %v677 = vld [vmem:[#allocation10 + $0x20] sm:$0xff]
    %v678 = vld [vmem:[#allocation10 + $0x28] sm:$0xff]
    %v679 = vld [vmem:[#allocation10 + $0x30] sm:$0xff]
    %v680 = vld [vmem:[#allocation10 + $0x38] sm:$0xff]
    %v681 = vld [vmem:[#allocation10 + $0x40] sm:$0xff]
    %v682 = vld [vmem:[#allocation10 + $0x48] sm:$0xff]
    %v683 = vld [vmem:[#allocation10 + $0x50] sm:$0xff]
    %v684 = vld [vmem:[#allocation10 + $0x58] sm:$0xff]
    %v685 = vld [vmem:[#allocation10 + $0x60] sm:$0xff]
    %v686 = vld [vmem:[#allocation10 + $0x68] sm:$0xff]
    %v687 = vld [vmem:[#allocation10 + $0x70] sm:$0xff]
    %v688 = vld [vmem:[#allocation10 + $0x78] sm:$0xff]
    %v689 = vld [vmem:[%s11] sm:$0x1]
    %v691 = vlaneseq
    %v692 = vshrl.u32 %v691, 7
    %v693 = vsub.s32 0, %v692
    %v694 = vrot.slane %v689, %v693
    %696 = vmatprep.subr.mxu0 0.0
    %697 = vmatpush1.msra.mxu0 %v673
    %698 = vmatprep.subr.mxu0 0.0
    %699 = vmatpush1.msra.mxu0 %v674
    %700 = vmatprep.subr.mxu0 0.0
    %701 = vmatpush1.msra.mxu0 %v675
    %702 = vmatprep.subr.mxu0 0.0
    %703 = vmatpush1.msra.mxu0 %v676
    %704 = vmatprep.subr.mxu0 0.0
    %705 = vmatpush1.msra.mxu0 %v677
    %706 = vmatprep.subr.mxu0 0.0
    %707 = vmatpush1.msra.mxu0 %v678
    %708 = vmatprep.subr.mxu0 0.0
    %709 = vmatpush1.msra.mxu0 %v679
    %710 = vmatprep.subr.mxu0 0.0
    %711 = vmatpush1.msra.mxu0 %v680
    %712 = vmatprep.subr.mxu0 0.0
    %713 = vmatpush1.msra.mxu0 %v681
    %714 = vmatprep.subr.mxu0 0.0
    %715 = vmatpush1.msra.mxu0 %v682
    %716 = vmatprep.subr.mxu0 0.0
    %717 = vmatpush1.msra.mxu0 %v683
    %718 = vmatprep.subr.mxu0 0.0
    %719 = vmatpush1.msra.mxu0 %v684
    %720 = vmatprep.subr.mxu0 0.0
    %721 = vmatpush1.msra.mxu0 %v685
    %722 = vmatprep.subr.mxu0 0.0
    %723 = vmatpush1.msra.mxu0 %v686
    %724 = vmatprep.subr.mxu0 0.0
    %725 = vmatpush1.msra.mxu0 %v687
    %726 = vmatprep.subr.mxu0 0.0
    %727 = vmatpush1.msra.mxu0 %v688
    %728 = vmatprep.subr.mxu0 0.0
    %729 = vmatpush1.msra.mxu0 0.0
    %730 = vmatprep.subr.mxu0 0.0
    %731 = vmatpush1.msra.mxu0 0.0
    %732 = vmatprep.subr.mxu0 0.0
    %733 = vmatpush1.msra.mxu0 0.0
    %734 = vmatprep.subr.mxu0 0.0
    %735 = vmatpush1.msra.mxu0 0.0
    %736 = vmatprep.subr.mxu0 0.0
    %737 = vmatpush1.msra.mxu0 0.0
    %738 = vmatprep.subr.mxu0 0.0
    %739 = vmatpush1.msra.mxu0 0.0
    %740 = vmatprep.subr.mxu0 0.0
    %741 = vmatpush1.msra.mxu0 0.0
    %742 = vmatprep.subr.mxu0 0.0
    %743 = vmatpush1.msra.mxu0 0.0
    %744 = vmatprep.subr.mxu0 0.0
    %745 = vmatpush1.msra.mxu0 0.0
    %746 = vmatprep.subr.mxu0 0.0
    %747 = vmatpush1.msra.mxu0 0.0
    %748 = vmatprep.subr.mxu0 0.0
    %749 = vmatpush1.msra.mxu0 0.0
    %750 = vmatprep.subr.mxu0 0.0
    %751 = vmatpush1.msra.mxu0 0.0
    %752 = vmatprep.subr.mxu0 0.0
    %753 = vmatpush1.msra.mxu0 0.0
    %754 = vmatprep.subr.mxu0 0.0
    %755 = vmatpush1.msra.mxu0 0.0
    %756 = vmatprep.subr.mxu0 0.0
    %757 = vmatpush1.msra.mxu0 0.0
    %758 = vmatprep.subr.mxu0 0.0
    %759 = vmatpush1.msra.mxu0 0.0
    %760 = vmatprep.mubr.f32.mxu0 0.0
    %761 = vmatmul.mubr.f32.gmra.mrb[0].mxu0 %v672
    %v762 = vpop.f32.mrb[0].mxu0
    %v763 = vadd.f32 %v694, %v762
    %v764 = vpop.f32.mrb[0].mxu0
    %765 = vdwg.mxu0
    %v766 = vld [vmem:[#allocation11] sm:$0xff]
    %v767 = vld [vmem:[#allocation11 + $0x8] sm:$0xff]
    %v768 = vld [vmem:[#allocation11 + $0x10] sm:$0xff]
    %v769 = vld [vmem:[#allocation11 + $0x18] sm:$0xff]
    %v770 = vld [vmem:[#allocation11 + $0x20] sm:$0xff]
    %v771 = vld [vmem:[#allocation11 + $0x28] sm:$0xff]
    %v772 = vld [vmem:[#allocation11 + $0x30] sm:$0xff]
    %v773 = vld [vmem:[#allocation11 + $0x38] sm:$0xff]
    %v774 = vld [vmem:[#allocation11 + $0x40] sm:$0xff]
    %v775 = vld [vmem:[#allocation11 + $0x48] sm:$0xff]
    %v776 = vld [vmem:[#allocation11 + $0x50] sm:$0xff]
    %v777 = vld [vmem:[#allocation11 + $0x58] sm:$0xff]
    %v778 = vld [vmem:[#allocation11 + $0x60] sm:$0xff]
    %v779 = vld [vmem:[#allocation11 + $0x68] sm:$0xff]
    %v780 = vld [vmem:[#allocation11 + $0x70] sm:$0xff]
    %v781 = vld [vmem:[#allocation11 + $0x78] sm:$0xff]
    %v782 = vld [vmem:[#allocation11 + $0x80] sm:$0xff]
    %v783 = vld [vmem:[#allocation11 + $0x88] sm:$0xff]
    %v784 = vld [vmem:[#allocation11 + $0x90] sm:$0xff]
    %v785 = vld [vmem:[#allocation11 + $0x98] sm:$0xff]
    %v786 = vld [vmem:[#allocation11 + $0xa0] sm:$0xff]
    %v787 = vld [vmem:[#allocation11 + $0xa8] sm:$0xff]
    %v788 = vld [vmem:[#allocation11 + $0xb0] sm:$0xff]
    %v789 = vld [vmem:[#allocation11 + $0xb8] sm:$0xff]
    %v790 = vld [vmem:[#allocation11 + $0xc0] sm:$0xff]
    %v791 = vld [vmem:[#allocation11 + $0xc8] sm:$0xff]
    %v792 = vld [vmem:[#allocation11 + $0xd0] sm:$0xff]
    %v793 = vld [vmem:[#allocation11 + $0xd8] sm:$0xff]
    %v794 = vld [vmem:[#allocation11 + $0xe0] sm:$0xff]
    %v795 = vld [vmem:[#allocation11 + $0xe8] sm:$0xff]
    %v796 = vld [vmem:[#allocation11 + $0xf0] sm:$0xff]
    %v797 = vld [vmem:[#allocation11 + $0xf8] sm:$0xff]
    %v798 = vld [vmem:[%s13] sm:$0x3]
    %v800 = vlaneseq
    %v801 = vshrl.u32 %v800, 7
    %v802 = vsub.s32 0, %v801
    %v803 = vrot.slane %v798, %v802
    %v804 = vlaneseq
    %v805 = vshrl.u32 %v804, 7
    %v806 = vsub.s32 1, %v805
    %v807 = vrot.slane %v798, %v806
    %810 = vmatprep.subr.mxu0 %v767
    %811 = vmatpush1.msra.mxu0 %v766
    %812 = vmatprep.subr.mxu0 %v769
    %813 = vmatpush1.msra.mxu0 %v768
    %814 = vmatprep.subr.mxu0 %v771
    %815 = vmatpush1.msra.mxu0 %v770
    %816 = vmatprep.subr.mxu0 %v773
    %817 = vmatpush1.msra.mxu0 %v772
    %818 = vmatprep.subr.mxu0 %v775
    %819 = vmatpush1.msra.mxu0 %v774
    %820 = vmatprep.subr.mxu0 %v777
    %821 = vmatpush1.msra.mxu0 %v776
    %822 = vmatprep.subr.mxu0 %v779
    %823 = vmatpush1.msra.mxu0 %v778
    %824 = vmatprep.subr.mxu0 %v781
    %825 = vmatpush1.msra.mxu0 %v780
    %826 = vmatprep.subr.mxu0 %v783
    %827 = vmatpush1.msra.mxu0 %v782
    %828 = vmatprep.subr.mxu0 %v785
    %829 = vmatpush1.msra.mxu0 %v784
    %830 = vmatprep.subr.mxu0 %v787
    %831 = vmatpush1.msra.mxu0 %v786
    %832 = vmatprep.subr.mxu0 %v789
    %833 = vmatpush1.msra.mxu0 %v788
    %834 = vmatprep.subr.mxu0 %v791
    %835 = vmatpush1.msra.mxu0 %v790
    %836 = vmatprep.subr.mxu0 %v793
    %837 = vmatpush1.msra.mxu0 %v792
    %838 = vmatprep.subr.mxu0 %v795
    %839 = vmatpush1.msra.mxu0 %v794
    %840 = vmatprep.subr.mxu0 %v797
    %841 = vmatpush1.msra.mxu0 %v796
    %842 = vmatprep.subr.mxu0 0.0
    %843 = vmatpush1.msra.mxu0 0.0
    %844 = vmatprep.subr.mxu0 0.0
    %845 = vmatpush1.msra.mxu0 0.0
    %846 = vmatprep.subr.mxu0 0.0
    %847 = vmatpush1.msra.mxu0 0.0
    %848 = vmatprep.subr.mxu0 0.0
    %849 = vmatpush1.msra.mxu0 0.0
    %850 = vmatprep.subr.mxu0 0.0
    %851 = vmatpush1.msra.mxu0 0.0
    %852 = vmatprep.subr.mxu0 0.0
    %853 = vmatpush1.msra.mxu0 0.0
    %854 = vmatprep.subr.mxu0 0.0
    %855 = vmatpush1.msra.mxu0 0.0
    %856 = vmatprep.subr.mxu0 0.0
    %857 = vmatpush1.msra.mxu0 0.0
    %858 = vmatprep.subr.mxu0 0.0
    %859 = vmatpush1.msra.mxu0 0.0
    %860 = vmatprep.subr.mxu0 0.0
    %861 = vmatpush1.msra.mxu0 0.0
    %862 = vmatprep.subr.mxu0 0.0
    %863 = vmatpush1.msra.mxu0 0.0
    %864 = vmatprep.subr.mxu0 0.0
    %865 = vmatpush1.msra.mxu0 0.0
    %866 = vmatprep.subr.mxu0 0.0
    %867 = vmatpush1.msra.mxu0 0.0
    %868 = vmatprep.subr.mxu0 0.0
    %869 = vmatpush1.msra.mxu0 0.0
    %870 = vmatprep.subr.mxu0 0.0
    %871 = vmatpush1.msra.mxu0 0.0
    %872 = vmatprep.subr.mxu0 0.0
    %873 = vmatpush1.msra.mxu0 0.0
    %874 = vmatprep.mubr.f32.mxu0 0.0
    %875 = vmatmul.mubr.f32.gmra.mrb[0].mxu0 %v763
    %v876 = vpop.f32.mrb[0].mxu0
    %v877 = vadd.f32 %v803, %v876
    %v878 = vpop.f32.mrb[0].mxu0
    %v879 = vadd.f32 %v807, %v878
    %880 = vdwg.mxu0
    %v881 = vld [vmem:[#allocation13] sm:$0xff]
    %v882 = vld [vmem:[#allocation13 + $0x8] sm:$0xff]
    %v883 = vld [vmem:[#allocation13 + $0x10] sm:$0xff]
    %v884 = vld [vmem:[#allocation13 + $0x18] sm:$0xff]
    %v885 = vld [vmem:[#allocation13 + $0x20] sm:$0xff]
    %v886 = vld [vmem:[#allocation13 + $0x28] sm:$0xff]
    %v887 = vld [vmem:[#allocation13 + $0x30] sm:$0xff]
    %v888 = vld [vmem:[#allocation13 + $0x38] sm:$0xff]
    %v889 = vld [vmem:[#allocation13 + $0x40] sm:$0xff]
    %v890 = vld [vmem:[#allocation13 + $0x48] sm:$0xff]
    %v891 = vld [vmem:[#allocation13 + $0x50] sm:$0xff]
    %v892 = vld [vmem:[#allocation13 + $0x58] sm:$0xff]
    %v893 = vld [vmem:[#allocation13 + $0x60] sm:$0xff]
    %v894 = vld [vmem:[#allocation13 + $0x68] sm:$0xff]
    %v895 = vld [vmem:[#allocation13 + $0x70] sm:$0xff]
    %v896 = vld [vmem:[#allocation13 + $0x78] sm:$0xff]
    %v897 = vld [vmem:[#allocation13 + $0x80] sm:$0xff]
    %v898 = vld [vmem:[#allocation13 + $0x88] sm:$0xff]
    %v899 = vld [vmem:[#allocation13 + $0x90] sm:$0xff]
    %v900 = vld [vmem:[#allocation13 + $0x98] sm:$0xff]
    %v901 = vld [vmem:[#allocation13 + $0xa0] sm:$0xff]
    %v902 = vld [vmem:[#allocation13 + $0xa8] sm:$0xff]
    %v903 = vld [vmem:[#allocation13 + $0xb0] sm:$0xff]
    %v904 = vld [vmem:[#allocation13 + $0xb8] sm:$0xff]
    %v905 = vld [vmem:[#allocation13 + $0xc0] sm:$0xff]
    %v906 = vld [vmem:[#allocation13 + $0xc8] sm:$0xff]
    %v907 = vld [vmem:[#allocation13 + $0xd0] sm:$0xff]
    %v908 = vld [vmem:[#allocation13 + $0xd8] sm:$0xff]
    %v909 = vld [vmem:[#allocation13 + $0xe0] sm:$0xff]
    %v910 = vld [vmem:[#allocation13 + $0xe8] sm:$0xff]
    %v911 = vld [vmem:[#allocation13 + $0xf0] sm:$0xff]
    %v912 = vld [vmem:[#allocation13 + $0xf8] sm:$0xff]
    %v913 = vld [vmem:[#allocation13 + $0x100] sm:$0xff]
    %v914 = vld [vmem:[#allocation13 + $0x108] sm:$0xff]
    %v915 = vld [vmem:[#allocation13 + $0x110] sm:$0xff]
    %v916 = vld [vmem:[#allocation13 + $0x118] sm:$0xff]
    %v917 = vld [vmem:[#allocation13 + $0x120] sm:$0xff]
    %v918 = vld [vmem:[#allocation13 + $0x128] sm:$0xff]
    %v919 = vld [vmem:[#allocation13 + $0x130] sm:$0xff]
    %v920 = vld [vmem:[#allocation13 + $0x138] sm:$0xff]
    %v921 = vld [vmem:[#allocation13 + $0x140] sm:$0xff]
    %v922 = vld [vmem:[#allocation13 + $0x148] sm:$0xff]
    %v923 = vld [vmem:[#allocation13 + $0x150] sm:$0xff]
    %v924 = vld [vmem:[#allocation13 + $0x158] sm:$0xff]
    %v925 = vld [vmem:[#allocation13 + $0x160] sm:$0xff]
    %v926 = vld [vmem:[#allocation13 + $0x168] sm:$0xff]
    %v927 = vld [vmem:[#allocation13 + $0x170] sm:$0xff]
    %v928 = vld [vmem:[#allocation13 + $0x178] sm:$0xff]
    %v929 = vld [vmem:[#allocation13 + $0x180] sm:$0xff]
    %v930 = vld [vmem:[#allocation13 + $0x188] sm:$0xff]
    %v931 = vld [vmem:[#allocation13 + $0x190] sm:$0xff]
    %v932 = vld [vmem:[#allocation13 + $0x198] sm:$0xff]
    %v933 = vld [vmem:[#allocation13 + $0x1a0] sm:$0xff]
    %v934 = vld [vmem:[#allocation13 + $0x1a8] sm:$0xff]
    %v935 = vld [vmem:[#allocation13 + $0x1b0] sm:$0xff]
    %v936 = vld [vmem:[#allocation13 + $0x1b8] sm:$0xff]
    %v937 = vld [vmem:[#allocation13 + $0x1c0] sm:$0xff]
    %v938 = vld [vmem:[#allocation13 + $0x1c8] sm:$0xff]
    %v939 = vld [vmem:[#allocation13 + $0x1d0] sm:$0xff]
    %v940 = vld [vmem:[#allocation13 + $0x1d8] sm:$0xff]
    %v941 = vld [vmem:[#allocation13 + $0x1e0] sm:$0xff]
    %v942 = vld [vmem:[#allocation13 + $0x1e8] sm:$0xff]
    %v943 = vld [vmem:[#allocation13 + $0x1f0] sm:$0xff]
    %v944 = vld [vmem:[#allocation13 + $0x1f8] sm:$0xff]
    %v945 = vld [vmem:[%s15] sm:$0x3]
    %v947 = vlaneseq
    %v948 = vshrl.u32 %v947, 7
    %v949 = vsub.s32 0, %v948
    %v950 = vrot.slane %v945, %v949
    %v951 = vlaneseq
    %v952 = vshrl.u32 %v951, 7
    %v953 = vsub.s32 1, %v952
    %v954 = vrot.slane %v945, %v953
    %957 = vmatprep.subr.mxu0 %v882
    %958 = vmatpush1.msra.mxu0 %v881
    %959 = vmatprep.subr.mxu0 %v884
    %960 = vmatpush1.msra.mxu0 %v883
    %961 = vmatprep.subr.mxu0 %v886
    %962 = vmatpush1.msra.mxu0 %v885
    %963 = vmatprep.subr.mxu0 %v888
    %964 = vmatpush1.msra.mxu0 %v887
    %965 = vmatprep.subr.mxu0 %v890
    %966 = vmatpush1.msra.mxu0 %v889
    %967 = vmatprep.subr.mxu0 %v892
    %968 = vmatpush1.msra.mxu0 %v891
    %969 = vmatprep.subr.mxu0 %v894
    %970 = vmatpush1.msra.mxu0 %v893
    %971 = vmatprep.subr.mxu0 %v896
    %972 = vmatpush1.msra.mxu0 %v895
    %973 = vmatprep.subr.mxu0 %v898
    %974 = vmatpush1.msra.mxu0 %v897
    %975 = vmatprep.subr.mxu0 %v900
    %976 = vmatpush1.msra.mxu0 %v899
    %977 = vmatprep.subr.mxu0 %v902
    %978 = vmatpush1.msra.mxu0 %v901
    %979 = vmatprep.subr.mxu0 %v904
    %980 = vmatpush1.msra.mxu0 %v903
    %981 = vmatprep.subr.mxu0 %v906
    %982 = vmatpush1.msra.mxu0 %v905
    %983 = vmatprep.subr.mxu0 %v908
    %984 = vmatpush1.msra.mxu0 %v907
    %985 = vmatprep.subr.mxu0 %v910
    %986 = vmatpush1.msra.mxu0 %v909
    %987 = vmatprep.subr.mxu0 %v912
    %988 = vmatpush1.msra.mxu0 %v911
    %989 = vmatprep.subr.mxu0 %v914
    %990 = vmatpush1.msra.mxu0 %v913
    %991 = vmatprep.subr.mxu0 %v916
    %992 = vmatpush1.msra.mxu0 %v915
    %993 = vmatprep.subr.mxu0 %v918
    %994 = vmatpush1.msra.mxu0 %v917
    %995 = vmatprep.subr.mxu0 %v920
    %996 = vmatpush1.msra.mxu0 %v919
    %997 = vmatprep.subr.mxu0 %v922
    %998 = vmatpush1.msra.mxu0 %v921
    %999 = vmatprep.subr.mxu0 %v924
    %1000 = vmatpush1.msra.mxu0 %v923
    %1001 = vmatprep.subr.mxu0 %v926
    %1002 = vmatpush1.msra.mxu0 %v925
    %1003 = vmatprep.subr.mxu0 %v928
    %1004 = vmatpush1.msra.mxu0 %v927
    %1005 = vmatprep.subr.mxu0 %v930
    %1006 = vmatpush1.msra.mxu0 %v929
    %1007 = vmatprep.subr.mxu0 %v932
    %1008 = vmatpush1.msra.mxu0 %v931
    %1009 = vmatprep.subr.mxu0 %v934
    %1010 = vmatpush1.msra.mxu0 %v933
    %1011 = vmatprep.subr.mxu0 %v936
    %1012 = vmatpush1.msra.mxu0 %v935
    %1013 = vmatprep.subr.mxu0 %v938
    %1014 = vmatpush1.msra.mxu0 %v937
    %1015 = vmatprep.subr.mxu0 %v940
    %1016 = vmatpush1.msra.mxu0 %v939
    %1017 = vmatprep.subr.mxu0 %v942
    %1018 = vmatpush1.msra.mxu0 %v941
    %1019 = vmatprep.subr.mxu0 %v944
    %1020 = vmatpush1.msra.mxu0 %v943
    %1021 = vmatprep.mubr.f32.mxu0 %v879
    %1022 = vmatmul.mubr.f32.gmra.mrb[0].mxu0 %v877
    %v1023 = vpop.f32.mrb[0].mxu0
    %v1024 = vadd.f32 %v950, %v1023
    %v1025 = vpop.f32.mrb[0].mxu0
    %v1026 = vadd.f32 %v954, %v1025
    %1027 = vdwg.mxu0
    %v1028 = vmax.f32 %v1024, 0.0
    %v1029 = vmax.f32 %v1026, 0.0
    %v1030 = vld [vmem:[#allocation14] sm:$0xff]
    %v1031 = vld [vmem:[#allocation14 + $0x8] sm:$0xff]
    %v1032 = vld [vmem:[#allocation14 + $0x10] sm:$0xff]
    %v1033 = vld [vmem:[#allocation14 + $0x18] sm:$0xff]
    %v1034 = vld [vmem:[#allocation14 + $0x20] sm:$0xff]
    %v1035 = vld [vmem:[#allocation14 + $0x28] sm:$0xff]
    %v1036 = vld [vmem:[#allocation14 + $0x30] sm:$0xff]
    %v1037 = vld [vmem:[#allocation14 + $0x38] sm:$0xff]
    %v1038 = vld [vmem:[#allocation14 + $0x40] sm:$0xff]
    %v1039 = vld [vmem:[#allocation14 + $0x48] sm:$0xff]
    %v1040 = vld [vmem:[#allocation14 + $0x50] sm:$0xff]
    %v1041 = vld [vmem:[#allocation14 + $0x58] sm:$0xff]
    %v1042 = vld [vmem:[#allocation14 + $0x60] sm:$0xff]
    %v1043 = vld [vmem:[#allocation14 + $0x68] sm:$0xff]
    %v1044 = vld [vmem:[#allocation14 + $0x70] sm:$0xff]
    %v1045 = vld [vmem:[#allocation14 + $0x78] sm:$0xff]
    %v1046 = vld [vmem:[#allocation14 + $0x80] sm:$0xff]
    %v1047 = vld [vmem:[#allocation14 + $0x88] sm:$0xff]
    %v1048 = vld [vmem:[#allocation14 + $0x90] sm:$0xff]
    %v1049 = vld [vmem:[#allocation14 + $0x98] sm:$0xff]
    %v1050 = vld [vmem:[#allocation14 + $0xa0] sm:$0xff]
    %v1051 = vld [vmem:[#allocation14 + $0xa8] sm:$0xff]
    %v1052 = vld [vmem:[#allocation14 + $0xb0] sm:$0xff]
    %v1053 = vld [vmem:[#allocation14 + $0xb8] sm:$0xff]
    %v1054 = vld [vmem:[#allocation14 + $0xc0] sm:$0xff]
    %v1055 = vld [vmem:[#allocation14 + $0xc8] sm:$0xff]
    %v1056 = vld [vmem:[#allocation14 + $0xd0] sm:$0xff]
    %v1057 = vld [vmem:[#allocation14 + $0xd8] sm:$0xff]
    %v1058 = vld [vmem:[#allocation14 + $0xe0] sm:$0xff]
    %v1059 = vld [vmem:[#allocation14 + $0xe8] sm:$0xff]
    %v1060 = vld [vmem:[#allocation14 + $0xf0] sm:$0xff]
    %v1061 = vld [vmem:[#allocation14 + $0xf8] sm:$0xff]
    %v1062 = vld [vmem:[#allocation14 + $0x100] sm:$0xff]
    %v1063 = vld [vmem:[#allocation14 + $0x108] sm:$0xff]
    %v1064 = vld [vmem:[#allocation14 + $0x110] sm:$0xff]
    %v1065 = vld [vmem:[#allocation14 + $0x118] sm:$0xff]
    %v1066 = vld [vmem:[#allocation14 + $0x120] sm:$0xff]
    %v1067 = vld [vmem:[#allocation14 + $0x128] sm:$0xff]
    %v1068 = vld [vmem:[#allocation14 + $0x130] sm:$0xff]
    %v1069 = vld [vmem:[#allocation14 + $0x138] sm:$0xff]
    %v1070 = vld [vmem:[#allocation14 + $0x140] sm:$0xff]
    %v1071 = vld [vmem:[#allocation14 + $0x148] sm:$0xff]
    %v1072 = vld [vmem:[#allocation14 + $0x150] sm:$0xff]
    %v1073 = vld [vmem:[#allocation14 + $0x158] sm:$0xff]
    %v1074 = vld [vmem:[#allocation14 + $0x160] sm:$0xff]
    %v1075 = vld [vmem:[#allocation14 + $0x168] sm:$0xff]
    %v1076 = vld [vmem:[#allocation14 + $0x170] sm:$0xff]
    %v1077 = vld [vmem:[#allocation14 + $0x178] sm:$0xff]
    %v1078 = vld [vmem:[#allocation14 + $0x180] sm:$0xff]
    %v1079 = vld [vmem:[#allocation14 + $0x188] sm:$0xff]
    %v1080 = vld [vmem:[#allocation14 + $0x190] sm:$0xff]
    %v1081 = vld [vmem:[#allocation14 + $0x198] sm:$0xff]
    %v1082 = vld [vmem:[#allocation14 + $0x1a0] sm:$0xff]
    %v1083 = vld [vmem:[#allocation14 + $0x1a8] sm:$0xff]
    %v1084 = vld [vmem:[#allocation14 + $0x1b0] sm:$0xff]
    %v1085 = vld [vmem:[#allocation14 + $0x1b8] sm:$0xff]
    %v1086 = vld [vmem:[#allocation14 + $0x1c0] sm:$0xff]
    %v1087 = vld [vmem:[#allocation14 + $0x1c8] sm:$0xff]
    %v1088 = vld [vmem:[#allocation14 + $0x1d0] sm:$0xff]
    %v1089 = vld [vmem:[#allocation14 + $0x1d8] sm:$0xff]
    %v1090 = vld [vmem:[#allocation14 + $0x1e0] sm:$0xff]
    %v1091 = vld [vmem:[#allocation14 + $0x1e8] sm:$0xff]
    %v1092 = vld [vmem:[#allocation14 + $0x1f0] sm:$0xff]
    %v1093 = vld [vmem:[#allocation14 + $0x1f8] sm:$0xff]
    %v1094 = vld [vmem:[#allocation14 + $0x200] sm:$0xff]
    %v1095 = vld [vmem:[#allocation14 + $0x208] sm:$0xff]
    %v1096 = vld [vmem:[#allocation14 + $0x210] sm:$0xff]
    %v1097 = vld [vmem:[#allocation14 + $0x218] sm:$0xff]
    %v1098 = vld [vmem:[#allocation14 + $0x220] sm:$0xff]
    %v1099 = vld [vmem:[#allocation14 + $0x228] sm:$0xff]
    %v1100 = vld [vmem:[#allocation14 + $0x230] sm:$0xff]
    %v1101 = vld [vmem:[#allocation14 + $0x238] sm:$0xff]
    %v1102 = vld [vmem:[#allocation14 + $0x240] sm:$0xff]
    %v1103 = vld [vmem:[#allocation14 + $0x248] sm:$0xff]
    %v1104 = vld [vmem:[#allocation14 + $0x250] sm:$0xff]
    %v1105 = vld [vmem:[#allocation14 + $0x258] sm:$0xff]
    %v1106 = vld [vmem:[#allocation14 + $0x260] sm:$0xff]
    %v1107 = vld [vmem:[#allocation14 + $0x268] sm:$0xff]
    %v1108 = vld [vmem:[#allocation14 + $0x270] sm:$0xff]
    %v1109 = vld [vmem:[#allocation14 + $0x278] sm:$0xff]
    %v1110 = vld [vmem:[#allocation14 + $0x280] sm:$0xff]
    %v1111 = vld [vmem:[#allocation14 + $0x288] sm:$0xff]
    %v1112 = vld [vmem:[#allocation14 + $0x290] sm:$0xff]
    %v1113 = vld [vmem:[#allocation14 + $0x298] sm:$0xff]
    %v1114 = vld [vmem:[#allocation14 + $0x2a0] sm:$0xff]
    %v1115 = vld [vmem:[#allocation14 + $0x2a8] sm:$0xff]
    %v1116 = vld [vmem:[#allocation14 + $0x2b0] sm:$0xff]
    %v1117 = vld [vmem:[#allocation14 + $0x2b8] sm:$0xff]
    %v1118 = vld [vmem:[#allocation14 + $0x2c0] sm:$0xff]
    %v1119 = vld [vmem:[#allocation14 + $0x2c8] sm:$0xff]
    %v1120 = vld [vmem:[#allocation14 + $0x2d0] sm:$0xff]
    %v1121 = vld [vmem:[#allocation14 + $0x2d8] sm:$0xff]
    %v1122 = vld [vmem:[#allocation14 + $0x2e0] sm:$0xff]
    %v1123 = vld [vmem:[#allocation14 + $0x2e8] sm:$0xff]
    %v1124 = vld [vmem:[#allocation14 + $0x2f0] sm:$0xff]
    %v1125 = vld [vmem:[#allocation14 + $0x2f8] sm:$0xff]
    %v1126 = vld [vmem:[#allocation14 + $0x300] sm:$0xff]
    %v1127 = vld [vmem:[#allocation14 + $0x308] sm:$0xff]
    %v1128 = vld [vmem:[#allocation14 + $0x310] sm:$0xff]
    %v1129 = vld [vmem:[#allocation14 + $0x318] sm:$0xff]
    %v1130 = vld [vmem:[#allocation14 + $0x320] sm:$0xff]
    %v1131 = vld [vmem:[#allocation14 + $0x328] sm:$0xff]
    %v1132 = vld [vmem:[#allocation14 + $0x330] sm:$0xff]
    %v1133 = vld [vmem:[#allocation14 + $0x338] sm:$0xff]
    %v1134 = vld [vmem:[#allocation14 + $0x340] sm:$0xff]
    %v1135 = vld [vmem:[#allocation14 + $0x348] sm:$0xff]
    %v1136 = vld [vmem:[#allocation14 + $0x350] sm:$0xff]
    %v1137 = vld [vmem:[#allocation14 + $0x358] sm:$0xff]
    %v1138 = vld [vmem:[#allocation14 + $0x360] sm:$0xff]
    %v1139 = vld [vmem:[#allocation14 + $0x368] sm:$0xff]
    %v1140 = vld [vmem:[#allocation14 + $0x370] sm:$0xff]
    %v1141 = vld [vmem:[#allocation14 + $0x378] sm:$0xff]
    %v1142 = vld [vmem:[#allocation14 + $0x380] sm:$0xff]
    %v1143 = vld [vmem:[#allocation14 + $0x388] sm:$0xff]
    %v1144 = vld [vmem:[#allocation14 + $0x390] sm:$0xff]
    %v1145 = vld [vmem:[#allocation14 + $0x398] sm:$0xff]
    %v1146 = vld [vmem:[#allocation14 + $0x3a0] sm:$0xff]
    %v1147 = vld [vmem:[#allocation14 + $0x3a8] sm:$0xff]
    %v1148 = vld [vmem:[#allocation14 + $0x3b0] sm:$0xff]
    %v1149 = vld [vmem:[#allocation14 + $0x3b8] sm:$0xff]
    %v1150 = vld [vmem:[#allocation14 + $0x3c0] sm:$0xff]
    %v1151 = vld [vmem:[#allocation14 + $0x3c8] sm:$0xff]
    %v1152 = vld [vmem:[#allocation14 + $0x3d0] sm:$0xff]
    %v1153 = vld [vmem:[#allocation14 + $0x3d8] sm:$0xff]
    %v1154 = vld [vmem:[#allocation14 + $0x3e0] sm:$0xff]
    %v1155 = vld [vmem:[#allocation14 + $0x3e8] sm:$0xff]
    %v1156 = vld [vmem:[#allocation14 + $0x3f0] sm:$0xff]
    %v1157 = vld [vmem:[#allocation14 + $0x3f8] sm:$0xff]
    %v1158 = vld [vmem:[#allocation14 + $0x400] sm:$0xff]
    %v1159 = vld [vmem:[#allocation14 + $0x408] sm:$0xff]
    %v1160 = vld [vmem:[#allocation14 + $0x410] sm:$0xff]
    %v1161 = vld [vmem:[#allocation14 + $0x418] sm:$0xff]
    %v1162 = vld [vmem:[#allocation14 + $0x420] sm:$0xff]
    %v1163 = vld [vmem:[#allocation14 + $0x428] sm:$0xff]
    %v1164 = vld [vmem:[#allocation14 + $0x430] sm:$0xff]
    %v1165 = vld [vmem:[#allocation14 + $0x438] sm:$0xff]
    %v1166 = vld [vmem:[#allocation14 + $0x440] sm:$0xff]
    %v1167 = vld [vmem:[#allocation14 + $0x448] sm:$0xff]
    %v1168 = vld [vmem:[#allocation14 + $0x450] sm:$0xff]
    %v1169 = vld [vmem:[#allocation14 + $0x458] sm:$0xff]
    %v1170 = vld [vmem:[#allocation14 + $0x460] sm:$0xff]
    %v1171 = vld [vmem:[#allocation14 + $0x468] sm:$0xff]
    %v1172 = vld [vmem:[#allocation14 + $0x470] sm:$0xff]
    %v1173 = vld [vmem:[#allocation14 + $0x478] sm:$0xff]
    %v1174 = vld [vmem:[#allocation14 + $0x480] sm:$0xff]
    %v1175 = vld [vmem:[#allocation14 + $0x488] sm:$0xff]
    %v1176 = vld [vmem:[#allocation14 + $0x490] sm:$0xff]
    %v1177 = vld [vmem:[#allocation14 + $0x498] sm:$0xff]
    %v1178 = vld [vmem:[#allocation14 + $0x4a0] sm:$0xff]
    %v1179 = vld [vmem:[#allocation14 + $0x4a8] sm:$0xff]
    %v1180 = vld [vmem:[#allocation14 + $0x4b0] sm:$0xff]
    %v1181 = vld [vmem:[#allocation14 + $0x4b8] sm:$0xff]
    %v1182 = vld [vmem:[#allocation14 + $0x4c0] sm:$0xff]
    %v1183 = vld [vmem:[#allocation14 + $0x4c8] sm:$0xff]
    %v1184 = vld [vmem:[#allocation14 + $0x4d0] sm:$0xff]
    %v1185 = vld [vmem:[#allocation14 + $0x4d8] sm:$0xff]
    %v1186 = vld [vmem:[#allocation14 + $0x4e0] sm:$0xff]
    %v1187 = vld [vmem:[#allocation14 + $0x4e8] sm:$0xff]
    %v1188 = vld [vmem:[#allocation14 + $0x4f0] sm:$0xff]
    %v1189 = vld [vmem:[#allocation14 + $0x4f8] sm:$0xff]
    %v1190 = vld [vmem:[#allocation14 + $0x500] sm:$0xff]
    %v1191 = vld [vmem:[#allocation14 + $0x508] sm:$0xff]
    %v1192 = vld [vmem:[#allocation14 + $0x510] sm:$0xff]
    %v1193 = vld [vmem:[#allocation14 + $0x518] sm:$0xff]
    %v1194 = vld [vmem:[#allocation14 + $0x520] sm:$0xff]
    %v1195 = vld [vmem:[#allocation14 + $0x528] sm:$0xff]
    %v1196 = vld [vmem:[#allocation14 + $0x530] sm:$0xff]
    %v1197 = vld [vmem:[#allocation14 + $0x538] sm:$0xff]
    %v1198 = vld [vmem:[#allocation14 + $0x540] sm:$0xff]
    %v1199 = vld [vmem:[#allocation14 + $0x548] sm:$0xff]
    %v1200 = vld [vmem:[#allocation14 + $0x550] sm:$0xff]
    %v1201 = vld [vmem:[#allocation14 + $0x558] sm:$0xff]
    %v1202 = vld [vmem:[#allocation14 + $0x560] sm:$0xff]
    %v1203 = vld [vmem:[#allocation14 + $0x568] sm:$0xff]
    %v1204 = vld [vmem:[#allocation14 + $0x570] sm:$0xff]
    %v1205 = vld [vmem:[#allocation14 + $0x578] sm:$0xff]
    %v1206 = vld [vmem:[#allocation14 + $0x580] sm:$0xff]
    %v1207 = vld [vmem:[#allocation14 + $0x588] sm:$0xff]
    %v1208 = vld [vmem:[#allocation14 + $0x590] sm:$0xff]
    %v1209 = vld [vmem:[#allocation14 + $0x598] sm:$0xff]
    %v1210 = vld [vmem:[#allocation14 + $0x5a0] sm:$0xff]
    %v1211 = vld [vmem:[#allocation14 + $0x5a8] sm:$0xff]
    %v1212 = vld [vmem:[#allocation14 + $0x5b0] sm:$0xff]
    %v1213 = vld [vmem:[#allocation14 + $0x5b8] sm:$0xff]
    %v1214 = vld [vmem:[#allocation14 + $0x5c0] sm:$0xff]
    %v1215 = vld [vmem:[#allocation14 + $0x5c8] sm:$0xff]
    %v1216 = vld [vmem:[#allocation14 + $0x5d0] sm:$0xff]
    %v1217 = vld [vmem:[#allocation14 + $0x5d8] sm:$0xff]
    %v1218 = vld [vmem:[#allocation14 + $0x5e0] sm:$0xff]
    %v1219 = vld [vmem:[#allocation14 + $0x5e8] sm:$0xff]
    %v1220 = vld [vmem:[#allocation14 + $0x5f0] sm:$0xff]
    %v1221 = vld [vmem:[#allocation14 + $0x5f8] sm:$0xff]
    %v1222 = vld [vmem:[%s17] sm:$0x3f]
    %v1224 = vlaneseq
    %v1225 = vshrl.u32 %v1224, 7
    %v1226 = vsub.s32 0, %v1225
    %v1227 = vrot.slane %v1222, %v1226
    %v1228 = vlaneseq
    %v1229 = vshrl.u32 %v1228, 7
    %v1230 = vsub.s32 1, %v1229
    %v1231 = vrot.slane %v1222, %v1230
    %v1232 = vlaneseq
    %v1233 = vshrl.u32 %v1232, 7
    %v1234 = vsub.s32 2, %v1233
    %v1235 = vrot.slane %v1222, %v1234
    %v1236 = vlaneseq
    %v1237 = vshrl.u32 %v1236, 7
    %v1238 = vsub.s32 3, %v1237
    %v1239 = vrot.slane %v1222, %v1238
    %v1240 = vlaneseq
    %v1241 = vshrl.u32 %v1240, 7
    %v1242 = vsub.s32 4, %v1241
    %v1243 = vrot.slane %v1222, %v1242
    %v1244 = vlaneseq
    %v1245 = vshrl.u32 %v1244, 7
    %v1246 = vsub.s32 5, %v1245
    %v1247 = vrot.slane %v1222, %v1246
    %1254 = vmatprep.subr.mxu0 %v1031
    %1255 = vmatpush1.msra.mxu0 %v1030
    %1256 = vmatprep.subr.mxu0 %v1037
    %1257 = vmatpush1.msra.mxu0 %v1036
    %1258 = vmatprep.subr.mxu0 %v1043
    %1259 = vmatpush1.msra.mxu0 %v1042
    %1260 = vmatprep.subr.mxu0 %v1049
    %1261 = vmatpush1.msra.mxu0 %v1048
    %1262 = vmatprep.subr.mxu0 %v1055
    %1263 = vmatpush1.msra.mxu0 %v1054
    %1264 = vmatprep.subr.mxu0 %v1061
    %1265 = vmatpush1.msra.mxu0 %v1060
    %1266 = vmatprep.subr.mxu0 %v1067
    %1267 = vmatpush1.msra.mxu0 %v1066
    %1268 = vmatprep.subr.mxu0 %v1073
    %1269 = vmatpush1.msra.mxu0 %v1072
    %1270 = vmatprep.subr.mxu0 %v1079
    %1271 = vmatpush1.msra.mxu0 %v1078
    %1272 = vmatprep.subr.mxu0 %v1085
    %1273 = vmatpush1.msra.mxu0 %v1084
    %1274 = vmatprep.subr.mxu0 %v1091
    %1275 = vmatpush1.msra.mxu0 %v1090
    %1276 = vmatprep.subr.mxu0 %v1097
    %1277 = vmatpush1.msra.mxu0 %v1096
    %1278 = vmatprep.subr.mxu0 %v1103
    %1279 = vmatpush1.msra.mxu0 %v1102
    %1280 = vmatprep.subr.mxu0 %v1109
    %1281 = vmatpush1.msra.mxu0 %v1108
    %1282 = vmatprep.subr.mxu0 %v1115
    %1283 = vmatpush1.msra.mxu0 %v1114
    %1284 = vmatprep.subr.mxu0 %v1121
    %1285 = vmatpush1.msra.mxu0 %v1120
    %1286 = vmatprep.subr.mxu0 %v1127
    %1287 = vmatpush1.msra.mxu0 %v1126
    %1288 = vmatprep.subr.mxu0 %v1133
    %1289 = vmatpush1.msra.mxu0 %v1132
    %1290 = vmatprep.subr.mxu0 %v1139
    %1291 = vmatpush1.msra.mxu0 %v1138
    %1292 = vmatprep.subr.mxu0 %v1145
    %1293 = vmatpush1.msra.mxu0 %v1144
    %1294 = vmatprep.subr.mxu0 %v1151
    %1295 = vmatpush1.msra.mxu0 %v1150
    %1296 = vmatprep.subr.mxu0 %v1157
    %1297 = vmatpush1.msra.mxu0 %v1156
    %1298 = vmatprep.subr.mxu0 %v1163
    %1299 = vmatpush1.msra.mxu0 %v1162
    %1300 = vmatprep.subr.mxu0 %v1169
    %1301 = vmatpush1.msra.mxu0 %v1168
    %1302 = vmatprep.subr.mxu0 %v1175
    %1303 = vmatpush1.msra.mxu0 %v1174
    %1304 = vmatprep.subr.mxu0 %v1181
    %1305 = vmatpush1.msra.mxu0 %v1180
    %1306 = vmatprep.subr.mxu0 %v1187
    %1307 = vmatpush1.msra.mxu0 %v1186
    %1308 = vmatprep.subr.mxu0 %v1193
    %1309 = vmatpush1.msra.mxu0 %v1192
    %1310 = vmatprep.subr.mxu0 %v1199
    %1311 = vmatpush1.msra.mxu0 %v1198
    %1312 = vmatprep.subr.mxu0 %v1205
    %1313 = vmatpush1.msra.mxu0 %v1204
    %1314 = vmatprep.subr.mxu0 %v1211
    %1315 = vmatpush1.msra.mxu0 %v1210
    %1316 = vmatprep.subr.mxu0 %v1217
    %1317 = vmatpush1.msra.mxu0 %v1216
    %1318 = vmatprep.mubr.f32.mxu0 %v1029
    %1319 = vmatmul.mubr.f32.gmra.mrb[0].mxu0 %v1028
    %v1320 = vpop.f32.mrb[0].mxu0
    %v1321 = vadd.f32 %v1227, %v1320
    %v1322 = vpop.f32.mrb[0].mxu0
    %v1323 = vadd.f32 %v1231, %v1322
    %1324 = vdwg.mxu0
    %1325 = vmatprep.subr.mxu0 %v1033
    %1326 = vmatpush1.msra.mxu0 %v1032
    %1327 = vmatprep.subr.mxu0 %v1039
    %1328 = vmatpush1.msra.mxu0 %v1038
    %1329 = vmatprep.subr.mxu0 %v1045
    %1330 = vmatpush1.msra.mxu0 %v1044
    %1331 = vmatprep.subr.mxu0 %v1051
    %1332 = vmatpush1.msra.mxu0 %v1050
    %1333 = vmatprep.subr.mxu0 %v1057
    %1334 = vmatpush1.msra.mxu0 %v1056
    %1335 = vmatprep.subr.mxu0 %v1063
    %1336 = vmatpush1.msra.mxu0 %v1062
    %1337 = vmatprep.subr.mxu0 %v1069
    %1338 = vmatpush1.msra.mxu0 %v1068
    %1339 = vmatprep.subr.mxu0 %v1075
    %1340 = vmatpush1.msra.mxu0 %v1074
    %1341 = vmatprep.subr.mxu0 %v1081
    %1342 = vmatpush1.msra.mxu0 %v1080
    %1343 = vmatprep.subr.mxu0 %v1087
    %1344 = vmatpush1.msra.mxu0 %v1086
    %1345 = vmatprep.subr.mxu0 %v1093
    %1346 = vmatpush1.msra.mxu0 %v1092
    %1347 = vmatprep.subr.mxu0 %v1099
    %1348 = vmatpush1.msra.mxu0 %v1098
    %1349 = vmatprep.subr.mxu0 %v1105
    %1350 = vmatpush1.msra.mxu0 %v1104
    %1351 = vmatprep.subr.mxu0 %v1111
    %1352 = vmatpush1.msra.mxu0 %v1110
    %1353 = vmatprep.subr.mxu0 %v1117
    %1354 = vmatpush1.msra.mxu0 %v1116
    %1355 = vmatprep.subr.mxu0 %v1123
    %1356 = vmatpush1.msra.mxu0 %v1122
    %1357 = vmatprep.subr.mxu0 %v1129
    %1358 = vmatpush1.msra.mxu0 %v1128
    %1359 = vmatprep.subr.mxu0 %v1135
    %1360 = vmatpush1.msra.mxu0 %v1134
    %1361 = vmatprep.subr.mxu0 %v1141
    %1362 = vmatpush1.msra.mxu0 %v1140
    %1363 = vmatprep.subr.mxu0 %v1147
    %1364 = vmatpush1.msra.mxu0 %v1146
    %1365 = vmatprep.subr.mxu0 %v1153
    %1366 = vmatpush1.msra.mxu0 %v1152
    %1367 = vmatprep.subr.mxu0 %v1159
    %1368 = vmatpush1.msra.mxu0 %v1158
    %1369 = vmatprep.subr.mxu0 %v1165
    %1370 = vmatpush1.msra.mxu0 %v1164
    %1371 = vmatprep.subr.mxu0 %v1171
    %1372 = vmatpush1.msra.mxu0 %v1170
    %1373 = vmatprep.subr.mxu0 %v1177
    %1374 = vmatpush1.msra.mxu0 %v1176
    %1375 = vmatprep.subr.mxu0 %v1183
    %1376 = vmatpush1.msra.mxu0 %v1182
    %1377 = vmatprep.subr.mxu0 %v1189
    %1378 = vmatpush1.msra.mxu0 %v1188
    %1379 = vmatprep.subr.mxu0 %v1195
    %1380 = vmatpush1.msra.mxu0 %v1194
    %1381 = vmatprep.subr.mxu0 %v1201
    %1382 = vmatpush1.msra.mxu0 %v1200
    %1383 = vmatprep.subr.mxu0 %v1207
    %1384 = vmatpush1.msra.mxu0 %v1206
    %1385 = vmatprep.subr.mxu0 %v1213
    %1386 = vmatpush1.msra.mxu0 %v1212
    %1387 = vmatprep.subr.mxu0 %v1219
    %1388 = vmatpush1.msra.mxu0 %v1218
    %1389 = vmatprep.mubr.f32.mxu0 %v1029
    %1390 = vmatmul.mubr.f32.gmra.mrb[0].mxu0 %v1028
    %v1391 = vpop.f32.mrb[0].mxu0
    %v1392 = vadd.f32 %v1235, %v1391
    %v1393 = vpop.f32.mrb[0].mxu0
    %v1394 = vadd.f32 %v1239, %v1393
    %1395 = vdwg.mxu0
    %1396 = vmatprep.subr.mxu0 %v1035
    %1397 = vmatpush1.msra.mxu0 %v1034
    %1398 = vmatprep.subr.mxu0 %v1041
    %1399 = vmatpush1.msra.mxu0 %v1040
    %1400 = vmatprep.subr.mxu0 %v1047
    %1401 = vmatpush1.msra.mxu0 %v1046
    %1402 = vmatprep.subr.mxu0 %v1053
    %1403 = vmatpush1.msra.mxu0 %v1052
    %1404 = vmatprep.subr.mxu0 %v1059
    %1405 = vmatpush1.msra.mxu0 %v1058
    %1406 = vmatprep.subr.mxu0 %v1065
    %1407 = vmatpush1.msra.mxu0 %v1064
    %1408 = vmatprep.subr.mxu0 %v1071
    %1409 = vmatpush1.msra.mxu0 %v1070
    %1410 = vmatprep.subr.mxu0 %v1077
    %1411 = vmatpush1.msra.mxu0 %v1076
    %1412 = vmatprep.subr.mxu0 %v1083
    %1413 = vmatpush1.msra.mxu0 %v1082
    %1414 = vmatprep.subr.mxu0 %v1089
    %1415 = vmatpush1.msra.mxu0 %v1088
    %1416 = vmatprep.subr.mxu0 %v1095
    %1417 = vmatpush1.msra.mxu0 %v1094
    %1418 = vmatprep.subr.mxu0 %v1101
    %1419 = vmatpush1.msra.mxu0 %v1100
    %1420 = vmatprep.subr.mxu0 %v1107
    %1421 = vmatpush1.msra.mxu0 %v1106
    %1422 = vmatprep.subr.mxu0 %v1113
    %1423 = vmatpush1.msra.mxu0 %v1112
    %1424 = vmatprep.subr.mxu0 %v1119
    %1425 = vmatpush1.msra.mxu0 %v1118
    %1426 = vmatprep.subr.mxu0 %v1125
    %1427 = vmatpush1.msra.mxu0 %v1124
    %1428 = vmatprep.subr.mxu0 %v1131
    %1429 = vmatpush1.msra.mxu0 %v1130
    %1430 = vmatprep.subr.mxu0 %v1137
    %1431 = vmatpush1.msra.mxu0 %v1136
    %1432 = vmatprep.subr.mxu0 %v1143
    %1433 = vmatpush1.msra.mxu0 %v1142
    %1434 = vmatprep.subr.mxu0 %v1149
    %1435 = vmatpush1.msra.mxu0 %v1148
    %1436 = vmatprep.subr.mxu0 %v1155
    %1437 = vmatpush1.msra.mxu0 %v1154
    %1438 = vmatprep.subr.mxu0 %v1161
    %1439 = vmatpush1.msra.mxu0 %v1160
    %1440 = vmatprep.subr.mxu0 %v1167
    %1441 = vmatpush1.msra.mxu0 %v1166
    %1442 = vmatprep.subr.mxu0 %v1173
    %1443 = vmatpush1.msra.mxu0 %v1172
    %1444 = vmatprep.subr.mxu0 %v1179
    %1445 = vmatpush1.msra.mxu0 %v1178
    %1446 = vmatprep.subr.mxu0 %v1185
    %1447 = vmatpush1.msra.mxu0 %v1184
    %1448 = vmatprep.subr.mxu0 %v1191
    %1449 = vmatpush1.msra.mxu0 %v1190
    %1450 = vmatprep.subr.mxu0 %v1197
    %1451 = vmatpush1.msra.mxu0 %v1196
    %1452 = vmatprep.subr.mxu0 %v1203
    %1453 = vmatpush1.msra.mxu0 %v1202
    %1454 = vmatprep.subr.mxu0 %v1209
    %1455 = vmatpush1.msra.mxu0 %v1208
    %1456 = vmatprep.subr.mxu0 %v1215
    %1457 = vmatpush1.msra.mxu0 %v1214
    %1458 = vmatprep.subr.mxu0 %v1221
    %1459 = vmatpush1.msra.mxu0 %v1220
    %1460 = vmatprep.mubr.f32.mxu0 %v1029
    %1461 = vmatmul.mubr.f32.gmra.mrb[0].mxu0 %v1028
    %v1462 = vpop.f32.mrb[0].mxu0
    %v1463 = vadd.f32 %v1243, %v1462
    %v1464 = vpop.f32.mrb[0].mxu0
    %v1465 = vadd.f32 %v1247, %v1464
    %1466 = vdwg.mxu0
    %v1467 = vld [vmem:[#allocation16] sm:$0xff]
    %v1468 = vld [vmem:[#allocation16 + $0x8] sm:$0xff]
    %v1469 = vld [vmem:[#allocation16 + $0x10] sm:$0xff]
    %v1470 = vld [vmem:[#allocation16 + $0x18] sm:$0xff]
    %v1471 = vld [vmem:[#allocation16 + $0x20] sm:$0xff]
    %v1472 = vld [vmem:[#allocation16 + $0x28] sm:$0xff]
    %v1473 = vld [vmem:[#allocation16 + $0x30] sm:$0xff]
    %v1474 = vld [vmem:[#allocation16 + $0x38] sm:$0xff]
    %v1475 = vld [vmem:[#allocation16 + $0x40] sm:$0xff]
    %v1476 = vld [vmem:[#allocation16 + $0x48] sm:$0xff]
    %v1477 = vld [vmem:[#allocation16 + $0x50] sm:$0xff]
    %v1478 = vld [vmem:[#allocation16 + $0x58] sm:$0xff]
    %v1479 = vld [vmem:[#allocation16 + $0x60] sm:$0xff]
    %v1480 = vld [vmem:[#allocation16 + $0x68] sm:$0xff]
    %v1481 = vld [vmem:[#allocation16 + $0x70] sm:$0xff]
    %v1482 = vld [vmem:[#allocation16 + $0x78] sm:$0xff]
    %v1483 = vld [vmem:[#allocation16 + $0x80] sm:$0xff]
    %v1484 = vld [vmem:[#allocation16 + $0x88] sm:$0xff]
    %v1485 = vld [vmem:[#allocation16 + $0x90] sm:$0xff]
    %v1486 = vld [vmem:[#allocation16 + $0x98] sm:$0xff]
    %v1487 = vld [vmem:[#allocation16 + $0xa0] sm:$0xff]
    %v1488 = vld [vmem:[#allocation16 + $0xa8] sm:$0xff]
    %v1489 = vld [vmem:[#allocation16 + $0xb0] sm:$0xff]
    %v1490 = vld [vmem:[#allocation16 + $0xb8] sm:$0xff]
    %v1491 = vld [vmem:[#allocation16 + $0xc0] sm:$0xff]
    %v1492 = vld [vmem:[#allocation16 + $0xc8] sm:$0xff]
    %v1493 = vld [vmem:[#allocation16 + $0xd0] sm:$0xff]
    %v1494 = vld [vmem:[#allocation16 + $0xd8] sm:$0xff]
    %v1495 = vld [vmem:[#allocation16 + $0xe0] sm:$0xff]
    %v1496 = vld [vmem:[#allocation16 + $0xe8] sm:$0xff]
    %v1497 = vld [vmem:[#allocation16 + $0xf0] sm:$0xff]
    %v1498 = vld [vmem:[#allocation16 + $0xf8] sm:$0xff]
    %v1499 = vld [vmem:[#allocation16 + $0x100] sm:$0xff]
    %v1500 = vld [vmem:[#allocation16 + $0x108] sm:$0xff]
    %v1501 = vld [vmem:[#allocation16 + $0x110] sm:$0xff]
    %v1502 = vld [vmem:[#allocation16 + $0x118] sm:$0xff]
    %v1503 = vld [vmem:[#allocation16 + $0x120] sm:$0xff]
    %v1504 = vld [vmem:[#allocation16 + $0x128] sm:$0xff]
    %v1505 = vld [vmem:[#allocation16 + $0x130] sm:$0xff]
    %v1506 = vld [vmem:[#allocation16 + $0x138] sm:$0xff]
    %v1507 = vld [vmem:[#allocation16 + $0x140] sm:$0xff]
    %v1508 = vld [vmem:[#allocation16 + $0x148] sm:$0xff]
    %v1509 = vld [vmem:[#allocation16 + $0x150] sm:$0xff]
    %v1510 = vld [vmem:[#allocation16 + $0x158] sm:$0xff]
    %v1511 = vld [vmem:[#allocation16 + $0x160] sm:$0xff]
    %v1512 = vld [vmem:[#allocation16 + $0x168] sm:$0xff]
    %v1513 = vld [vmem:[#allocation16 + $0x170] sm:$0xff]
    %v1514 = vld [vmem:[#allocation16 + $0x178] sm:$0xff]
    %v1515 = vld [vmem:[#allocation16 + $0x180] sm:$0xff]
    %v1516 = vld [vmem:[#allocation16 + $0x188] sm:$0xff]
    %v1517 = vld [vmem:[#allocation16 + $0x190] sm:$0xff]
    %v1518 = vld [vmem:[#allocation16 + $0x198] sm:$0xff]
    %v1519 = vld [vmem:[#allocation16 + $0x1a0] sm:$0xff]
    %v1520 = vld [vmem:[#allocation16 + $0x1a8] sm:$0xff]
    %v1521 = vld [vmem:[#allocation16 + $0x1b0] sm:$0xff]
    %v1522 = vld [vmem:[#allocation16 + $0x1b8] sm:$0xff]
    %v1523 = vld [vmem:[#allocation16 + $0x1c0] sm:$0xff]
    %v1524 = vld [vmem:[#allocation16 + $0x1c8] sm:$0xff]
    %v1525 = vld [vmem:[#allocation16 + $0x1d0] sm:$0xff]
    %v1526 = vld [vmem:[#allocation16 + $0x1d8] sm:$0xff]
    %v1527 = vld [vmem:[#allocation16 + $0x1e0] sm:$0xff]
    %v1528 = vld [vmem:[#allocation16 + $0x1e8] sm:$0xff]
    %v1529 = vld [vmem:[#allocation16 + $0x1f0] sm:$0xff]
    %v1530 = vld [vmem:[#allocation16 + $0x1f8] sm:$0xff]
    %v1531 = vld [vmem:[#allocation16 + $0x200] sm:$0xff]
    %v1532 = vld [vmem:[#allocation16 + $0x208] sm:$0xff]
    %v1533 = vld [vmem:[#allocation16 + $0x210] sm:$0xff]
    %v1534 = vld [vmem:[#allocation16 + $0x218] sm:$0xff]
    %v1535 = vld [vmem:[#allocation16 + $0x220] sm:$0xff]
    %v1536 = vld [vmem:[#allocation16 + $0x228] sm:$0xff]
    %v1537 = vld [vmem:[#allocation16 + $0x230] sm:$0xff]
    %v1538 = vld [vmem:[#allocation16 + $0x238] sm:$0xff]
    %v1539 = vld [vmem:[#allocation16 + $0x240] sm:$0xff]
    %v1540 = vld [vmem:[#allocation16 + $0x248] sm:$0xff]
    %v1541 = vld [vmem:[#allocation16 + $0x250] sm:$0xff]
    %v1542 = vld [vmem:[#allocation16 + $0x258] sm:$0xff]
    %v1543 = vld [vmem:[#allocation16 + $0x260] sm:$0xff]
    %v1544 = vld [vmem:[#allocation16 + $0x268] sm:$0xff]
    %v1545 = vld [vmem:[#allocation16 + $0x270] sm:$0xff]
    %v1546 = vld [vmem:[#allocation16 + $0x278] sm:$0xff]
    %v1547 = vld [vmem:[#allocation16 + $0x280] sm:$0xff]
    %v1548 = vld [vmem:[#allocation16 + $0x288] sm:$0xff]
    %v1549 = vld [vmem:[#allocation16 + $0x290] sm:$0xff]
    %v1550 = vld [vmem:[#allocation16 + $0x298] sm:$0xff]
    %v1551 = vld [vmem:[#allocation16 + $0x2a0] sm:$0xff]
    %v1552 = vld [vmem:[#allocation16 + $0x2a8] sm:$0xff]
    %v1553 = vld [vmem:[#allocation16 + $0x2b0] sm:$0xff]
    %v1554 = vld [vmem:[#allocation16 + $0x2b8] sm:$0xff]
    %v1555 = vld [vmem:[#allocation16 + $0x2c0] sm:$0xff]
    %v1556 = vld [vmem:[#allocation16 + $0x2c8] sm:$0xff]
    %v1557 = vld [vmem:[#allocation16 + $0x2d0] sm:$0xff]
    %v1558 = vld [vmem:[#allocation16 + $0x2d8] sm:$0xff]
    %v1559 = vld [vmem:[#allocation16 + $0x2e0] sm:$0xff]
    %v1560 = vld [vmem:[#allocation16 + $0x2e8] sm:$0xff]
    %v1561 = vld [vmem:[#allocation16 + $0x2f0] sm:$0xff]
    %v1562 = vld [vmem:[#allocation16 + $0x2f8] sm:$0xff]
    %v1563 = vld [vmem:[#allocation16 + $0x300] sm:$0xff]
    %v1564 = vld [vmem:[#allocation16 + $0x308] sm:$0xff]
    %v1565 = vld [vmem:[#allocation16 + $0x310] sm:$0xff]
    %v1566 = vld [vmem:[#allocation16 + $0x318] sm:$0xff]
    %v1567 = vld [vmem:[#allocation16 + $0x320] sm:$0xff]
    %v1568 = vld [vmem:[#allocation16 + $0x328] sm:$0xff]
    %v1569 = vld [vmem:[#allocation16 + $0x330] sm:$0xff]
    %v1570 = vld [vmem:[#allocation16 + $0x338] sm:$0xff]
    %v1571 = vld [vmem:[#allocation16 + $0x340] sm:$0xff]
    %v1572 = vld [vmem:[#allocation16 + $0x348] sm:$0xff]
    %v1573 = vld [vmem:[#allocation16 + $0x350] sm:$0xff]
    %v1574 = vld [vmem:[#allocation16 + $0x358] sm:$0xff]
    %v1575 = vld [vmem:[#allocation16 + $0x360] sm:$0xff]
    %v1576 = vld [vmem:[#allocation16 + $0x368] sm:$0xff]
    %v1577 = vld [vmem:[#allocation16 + $0x370] sm:$0xff]
    %v1578 = vld [vmem:[#allocation16 + $0x378] sm:$0xff]
    %v1579 = vld [vmem:[#allocation16 + $0x380] sm:$0xff]
    %v1580 = vld [vmem:[#allocation16 + $0x388] sm:$0xff]
    %v1581 = vld [vmem:[#allocation16 + $0x390] sm:$0xff]
    %v1582 = vld [vmem:[#allocation16 + $0x398] sm:$0xff]
    %v1583 = vld [vmem:[#allocation16 + $0x3a0] sm:$0xff]
    %v1584 = vld [vmem:[#allocation16 + $0x3a8] sm:$0xff]
    %v1585 = vld [vmem:[#allocation16 + $0x3b0] sm:$0xff]
    %v1586 = vld [vmem:[#allocation16 + $0x3b8] sm:$0xff]
    %v1587 = vld [vmem:[#allocation16 + $0x3c0] sm:$0xff]
    %v1588 = vld [vmem:[#allocation16 + $0x3c8] sm:$0xff]
    %v1589 = vld [vmem:[#allocation16 + $0x3d0] sm:$0xff]
    %v1590 = vld [vmem:[#allocation16 + $0x3d8] sm:$0xff]
    %v1591 = vld [vmem:[#allocation16 + $0x3e0] sm:$0xff]
    %v1592 = vld [vmem:[#allocation16 + $0x3e8] sm:$0xff]
    %v1593 = vld [vmem:[#allocation16 + $0x3f0] sm:$0xff]
    %v1594 = vld [vmem:[#allocation16 + $0x3f8] sm:$0xff]
    %v1595 = vld [vmem:[#allocation16 + $0x400] sm:$0xff]
    %v1596 = vld [vmem:[#allocation16 + $0x408] sm:$0xff]
    %v1597 = vld [vmem:[#allocation16 + $0x410] sm:$0xff]
    %v1598 = vld [vmem:[#allocation16 + $0x418] sm:$0xff]
    %v1599 = vld [vmem:[#allocation16 + $0x420] sm:$0xff]
    %v1600 = vld [vmem:[#allocation16 + $0x428] sm:$0xff]
    %v1601 = vld [vmem:[#allocation16 + $0x430] sm:$0xff]
    %v1602 = vld [vmem:[#allocation16 + $0x438] sm:$0xff]
    %v1603 = vld [vmem:[#allocation16 + $0x440] sm:$0xff]
    %v1604 = vld [vmem:[#allocation16 + $0x448] sm:$0xff]
    %v1605 = vld [vmem:[#allocation16 + $0x450] sm:$0xff]
    %v1606 = vld [vmem:[#allocation16 + $0x458] sm:$0xff]
    %v1607 = vld [vmem:[#allocation16 + $0x460] sm:$0xff]
    %v1608 = vld [vmem:[#allocation16 + $0x468] sm:$0xff]
    %v1609 = vld [vmem:[#allocation16 + $0x470] sm:$0xff]
    %v1610 = vld [vmem:[#allocation16 + $0x478] sm:$0xff]
    %v1611 = vld [vmem:[#allocation16 + $0x480] sm:$0xff]
    %v1612 = vld [vmem:[#allocation16 + $0x488] sm:$0xff]
    %v1613 = vld [vmem:[#allocation16 + $0x490] sm:$0xff]
    %v1614 = vld [vmem:[#allocation16 + $0x498] sm:$0xff]
    %v1615 = vld [vmem:[#allocation16 + $0x4a0] sm:$0xff]
    %v1616 = vld [vmem:[#allocation16 + $0x4a8] sm:$0xff]
    %v1617 = vld [vmem:[#allocation16 + $0x4b0] sm:$0xff]
    %v1618 = vld [vmem:[#allocation16 + $0x4b8] sm:$0xff]
    %v1619 = vld [vmem:[#allocation16 + $0x4c0] sm:$0xff]
    %v1620 = vld [vmem:[#allocation16 + $0x4c8] sm:$0xff]
    %v1621 = vld [vmem:[#allocation16 + $0x4d0] sm:$0xff]
    %v1622 = vld [vmem:[#allocation16 + $0x4d8] sm:$0xff]
    %v1623 = vld [vmem:[#allocation16 + $0x4e0] sm:$0xff]
    %v1624 = vld [vmem:[#allocation16 + $0x4e8] sm:$0xff]
    %v1625 = vld [vmem:[#allocation16 + $0x4f0] sm:$0xff]
    %v1626 = vld [vmem:[#allocation16 + $0x4f8] sm:$0xff]
    %v1627 = vld [vmem:[#allocation16 + $0x500] sm:$0xff]
    %v1628 = vld [vmem:[#allocation16 + $0x508] sm:$0xff]
    %v1629 = vld [vmem:[#allocation16 + $0x510] sm:$0xff]
    %v1630 = vld [vmem:[#allocation16 + $0x518] sm:$0xff]
    %v1631 = vld [vmem:[#allocation16 + $0x520] sm:$0xff]
    %v1632 = vld [vmem:[#allocation16 + $0x528] sm:$0xff]
    %v1633 = vld [vmem:[#allocation16 + $0x530] sm:$0xff]
    %v1634 = vld [vmem:[#allocation16 + $0x538] sm:$0xff]
    %v1635 = vld [vmem:[#allocation16 + $0x540] sm:$0xff]
    %v1636 = vld [vmem:[#allocation16 + $0x548] sm:$0xff]
    %v1637 = vld [vmem:[#allocation16 + $0x550] sm:$0xff]
    %v1638 = vld [vmem:[#allocation16 + $0x558] sm:$0xff]
    %v1639 = vld [vmem:[#allocation16 + $0x560] sm:$0xff]
    %v1640 = vld [vmem:[#allocation16 + $0x568] sm:$0xff]
    %v1641 = vld [vmem:[#allocation16 + $0x570] sm:$0xff]
    %v1642 = vld [vmem:[#allocation16 + $0x578] sm:$0xff]
    %v1643 = vld [vmem:[#allocation16 + $0x580] sm:$0xff]
    %v1644 = vld [vmem:[#allocation16 + $0x588] sm:$0xff]
    %v1645 = vld [vmem:[#allocation16 + $0x590] sm:$0xff]
    %v1646 = vld [vmem:[#allocation16 + $0x598] sm:$0xff]
    %v1647 = vld [vmem:[#allocation16 + $0x5a0] sm:$0xff]
    %v1648 = vld [vmem:[#allocation16 + $0x5a8] sm:$0xff]
    %v1649 = vld [vmem:[#allocation16 + $0x5b0] sm:$0xff]
    %v1650 = vld [vmem:[#allocation16 + $0x5b8] sm:$0xff]
    %v1651 = vld [vmem:[#allocation16 + $0x5c0] sm:$0xff]
    %v1652 = vld [vmem:[#allocation16 + $0x5c8] sm:$0xff]
    %v1653 = vld [vmem:[#allocation16 + $0x5d0] sm:$0xff]
    %v1654 = vld [vmem:[#allocation16 + $0x5d8] sm:$0xff]
    %v1655 = vld [vmem:[#allocation16 + $0x5e0] sm:$0xff]
    %v1656 = vld [vmem:[#allocation16 + $0x5e8] sm:$0xff]
    %v1657 = vld [vmem:[#allocation16 + $0x5f0] sm:$0xff]
    %v1658 = vld [vmem:[#allocation16 + $0x5f8] sm:$0xff]
    %v1659 = vld [vmem:[%s19] sm:$0x3]
    %v1661 = vlaneseq
    %v1662 = vshrl.u32 %v1661, 7
    %v1663 = vsub.s32 0, %v1662
    %v1664 = vrot.slane %v1659, %v1663
    %v1665 = vlaneseq
    %v1666 = vshrl.u32 %v1665, 7
    %v1667 = vsub.s32 1, %v1666
    %v1668 = vrot.slane %v1659, %v1667
    %1671 = vmatprep.subr.mxu0 %v1468
    %1672 = vmatpush1.msra.mxu0 %v1467
    %1673 = vmatprep.subr.mxu0 %v1470
    %1674 = vmatpush1.msra.mxu0 %v1469
    %1675 = vmatprep.subr.mxu0 %v1472
    %1676 = vmatpush1.msra.mxu0 %v1471
    %1677 = vmatprep.subr.mxu0 %v1474
    %1678 = vmatpush1.msra.mxu0 %v1473
    %1679 = vmatprep.subr.mxu0 %v1476
    %1680 = vmatpush1.msra.mxu0 %v1475
    %1681 = vmatprep.subr.mxu0 %v1478
    %1682 = vmatpush1.msra.mxu0 %v1477
    %1683 = vmatprep.subr.mxu0 %v1480
    %1684 = vmatpush1.msra.mxu0 %v1479
    %1685 = vmatprep.subr.mxu0 %v1482
    %1686 = vmatpush1.msra.mxu0 %v1481
    %1687 = vmatprep.subr.mxu0 %v1484
    %1688 = vmatpush1.msra.mxu0 %v1483
    %1689 = vmatprep.subr.mxu0 %v1486
    %1690 = vmatpush1.msra.mxu0 %v1485
    %1691 = vmatprep.subr.mxu0 %v1488
    %1692 = vmatpush1.msra.mxu0 %v1487
    %1693 = vmatprep.subr.mxu0 %v1490
    %1694 = vmatpush1.msra.mxu0 %v1489
    %1695 = vmatprep.subr.mxu0 %v1492
    %1696 = vmatpush1.msra.mxu0 %v1491
    %1697 = vmatprep.subr.mxu0 %v1494
    %1698 = vmatpush1.msra.mxu0 %v1493
    %1699 = vmatprep.subr.mxu0 %v1496
    %1700 = vmatpush1.msra.mxu0 %v1495
    %1701 = vmatprep.subr.mxu0 %v1498
    %1702 = vmatpush1.msra.mxu0 %v1497
    %1703 = vmatprep.subr.mxu0 %v1500
    %1704 = vmatpush1.msra.mxu0 %v1499
    %1705 = vmatprep.subr.mxu0 %v1502
    %1706 = vmatpush1.msra.mxu0 %v1501
    %1707 = vmatprep.subr.mxu0 %v1504
    %1708 = vmatpush1.msra.mxu0 %v1503
    %1709 = vmatprep.subr.mxu0 %v1506
    %1710 = vmatpush1.msra.mxu0 %v1505
    %1711 = vmatprep.subr.mxu0 %v1508
    %1712 = vmatpush1.msra.mxu0 %v1507
    %1713 = vmatprep.subr.mxu0 %v1510
    %1714 = vmatpush1.msra.mxu0 %v1509
    %1715 = vmatprep.subr.mxu0 %v1512
    %1716 = vmatpush1.msra.mxu0 %v1511
    %1717 = vmatprep.subr.mxu0 %v1514
    %1718 = vmatpush1.msra.mxu0 %v1513
    %1719 = vmatprep.subr.mxu0 %v1516
    %1720 = vmatpush1.msra.mxu0 %v1515
    %1721 = vmatprep.subr.mxu0 %v1518
    %1722 = vmatpush1.msra.mxu0 %v1517
    %1723 = vmatprep.subr.mxu0 %v1520
    %1724 = vmatpush1.msra.mxu0 %v1519
    %1725 = vmatprep.subr.mxu0 %v1522
    %1726 = vmatpush1.msra.mxu0 %v1521
    %1727 = vmatprep.subr.mxu0 %v1524
    %1728 = vmatpush1.msra.mxu0 %v1523
    %1729 = vmatprep.subr.mxu0 %v1526
    %1730 = vmatpush1.msra.mxu0 %v1525
    %1731 = vmatprep.subr.mxu0 %v1528
    %1732 = vmatpush1.msra.mxu0 %v1527
    %1733 = vmatprep.subr.mxu0 %v1530
    %1734 = vmatpush1.msra.mxu0 %v1529
    %1735 = vmatprep.mubr.f32.mxu0 %v1323
    %1736 = vmatmul.mubr.f32.gmra.mrb[0].mxu0 %v1321
    %v1737 = vpop.f32.mrb[0].mxu0
    %v1738 = vadd.f32 %v1664, %v1737
    %v1739 = vpop.f32.mrb[0].mxu0
    %v1740 = vadd.f32 %v1668, %v1739
    %1741 = vdwg.mxu0
    %1742 = vmatprep.subr.mxu0 %v1532
    %1743 = vmatpush1.msra.mxu0 %v1531
    %1744 = vmatprep.subr.mxu0 %v1534
    %1745 = vmatpush1.msra.mxu0 %v1533
    %1746 = vmatprep.subr.mxu0 %v1536
    %1747 = vmatpush1.msra.mxu0 %v1535
    %1748 = vmatprep.subr.mxu0 %v1538
    %1749 = vmatpush1.msra.mxu0 %v1537
    %1750 = vmatprep.subr.mxu0 %v1540
    %1751 = vmatpush1.msra.mxu0 %v1539
    %1752 = vmatprep.subr.mxu0 %v1542
    %1753 = vmatpush1.msra.mxu0 %v1541
    %1754 = vmatprep.subr.mxu0 %v1544
    %1755 = vmatpush1.msra.mxu0 %v1543
    %1756 = vmatprep.subr.mxu0 %v1546
    %1757 = vmatpush1.msra.mxu0 %v1545
    %1758 = vmatprep.subr.mxu0 %v1548
    %1759 = vmatpush1.msra.mxu0 %v1547
    %1760 = vmatprep.subr.mxu0 %v1550
    %1761 = vmatpush1.msra.mxu0 %v1549
    %1762 = vmatprep.subr.mxu0 %v1552
    %1763 = vmatpush1.msra.mxu0 %v1551
    %1764 = vmatprep.subr.mxu0 %v1554
    %1765 = vmatpush1.msra.mxu0 %v1553
    %1766 = vmatprep.subr.mxu0 %v1556
    %1767 = vmatpush1.msra.mxu0 %v1555
    %1768 = vmatprep.subr.mxu0 %v1558
    %1769 = vmatpush1.msra.mxu0 %v1557
    %1770 = vmatprep.subr.mxu0 %v1560
    %1771 = vmatpush1.msra.mxu0 %v1559
    %1772 = vmatprep.subr.mxu0 %v1562
    %1773 = vmatpush1.msra.mxu0 %v1561
    %1774 = vmatprep.subr.mxu0 %v1564
    %1775 = vmatpush1.msra.mxu0 %v1563
    %1776 = vmatprep.subr.mxu0 %v1566
    %1777 = vmatpush1.msra.mxu0 %v1565
    %1778 = vmatprep.subr.mxu0 %v1568
    %1779 = vmatpush1.msra.mxu0 %v1567
    %1780 = vmatprep.subr.mxu0 %v1570
    %1781 = vmatpush1.msra.mxu0 %v1569
    %1782 = vmatprep.subr.mxu0 %v1572
    %1783 = vmatpush1.msra.mxu0 %v1571
    %1784 = vmatprep.subr.mxu0 %v1574
    %1785 = vmatpush1.msra.mxu0 %v1573
    %1786 = vmatprep.subr.mxu0 %v1576
    %1787 = vmatpush1.msra.mxu0 %v1575
    %1788 = vmatprep.subr.mxu0 %v1578
    %1789 = vmatpush1.msra.mxu0 %v1577
    %1790 = vmatprep.subr.mxu0 %v1580
    %1791 = vmatpush1.msra.mxu0 %v1579
    %1792 = vmatprep.subr.mxu0 %v1582
    %1793 = vmatpush1.msra.mxu0 %v1581
    %1794 = vmatprep.subr.mxu0 %v1584
    %1795 = vmatpush1.msra.mxu0 %v1583
    %1796 = vmatprep.subr.mxu0 %v1586
    %1797 = vmatpush1.msra.mxu0 %v1585
    %1798 = vmatprep.subr.mxu0 %v1588
    %1799 = vmatpush1.msra.mxu0 %v1587
    %1800 = vmatprep.subr.mxu0 %v1590
    %1801 = vmatpush1.msra.mxu0 %v1589
    %1802 = vmatprep.subr.mxu0 %v1592
    %1803 = vmatpush1.msra.mxu0 %v1591
    %1804 = vmatprep.subr.mxu0 %v1594
    %1805 = vmatpush1.msra.mxu0 %v1593
    %1806 = vmatprep.mubr.f32.mxu0 %v1394
    %1807 = vmatmul.mubr.f32.gmra.mrb[0].mxu0 %v1392
    %v1808 = vpop.f32.mrb[0].mxu0
    %v1809 = vadd.f32 %v1738, %v1808
    %v1810 = vpop.f32.mrb[0].mxu0
    %v1811 = vadd.f32 %v1740, %v1810
    %1812 = vdwg.mxu0
    %1813 = vmatprep.subr.mxu0 %v1596
    %1814 = vmatpush1.msra.mxu0 %v1595
    %1815 = vmatprep.subr.mxu0 %v1598
    %1816 = vmatpush1.msra.mxu0 %v1597
    %1817 = vmatprep.subr.mxu0 %v1600
    %1818 = vmatpush1.msra.mxu0 %v1599
    %1819 = vmatprep.subr.mxu0 %v1602
    %1820 = vmatpush1.msra.mxu0 %v1601
    %1821 = vmatprep.subr.mxu0 %v1604
    %1822 = vmatpush1.msra.mxu0 %v1603
    %1823 = vmatprep.subr.mxu0 %v1606
    %1824 = vmatpush1.msra.mxu0 %v1605
    %1825 = vmatprep.subr.mxu0 %v1608
    %1826 = vmatpush1.msra.mxu0 %v1607
    %1827 = vmatprep.subr.mxu0 %v1610
    %1828 = vmatpush1.msra.mxu0 %v1609
    %1829 = vmatprep.subr.mxu0 %v1612
    %1830 = vmatpush1.msra.mxu0 %v1611
    %1831 = vmatprep.subr.mxu0 %v1614
    %1832 = vmatpush1.msra.mxu0 %v1613
    %1833 = vmatprep.subr.mxu0 %v1616
    %1834 = vmatpush1.msra.mxu0 %v1615
    %1835 = vmatprep.subr.mxu0 %v1618
    %1836 = vmatpush1.msra.mxu0 %v1617
    %1837 = vmatprep.subr.mxu0 %v1620
    %1838 = vmatpush1.msra.mxu0 %v1619
    %1839 = vmatprep.subr.mxu0 %v1622
    %1840 = vmatpush1.msra.mxu0 %v1621
    %1841 = vmatprep.subr.mxu0 %v1624
    %1842 = vmatpush1.msra.mxu0 %v1623
    %1843 = vmatprep.subr.mxu0 %v1626
    %1844 = vmatpush1.msra.mxu0 %v1625
    %1845 = vmatprep.subr.mxu0 %v1628
    %1846 = vmatpush1.msra.mxu0 %v1627
    %1847 = vmatprep.subr.mxu0 %v1630
    %1848 = vmatpush1.msra.mxu0 %v1629
    %1849 = vmatprep.subr.mxu0 %v1632
    %1850 = vmatpush1.msra.mxu0 %v1631
    %1851 = vmatprep.subr.mxu0 %v1634
    %1852 = vmatpush1.msra.mxu0 %v1633
    %1853 = vmatprep.subr.mxu0 %v1636
    %1854 = vmatpush1.msra.mxu0 %v1635
    %1855 = vmatprep.subr.mxu0 %v1638
    %1856 = vmatpush1.msra.mxu0 %v1637
    %1857 = vmatprep.subr.mxu0 %v1640
    %1858 = vmatpush1.msra.mxu0 %v1639
    %1859 = vmatprep.subr.mxu0 %v1642
    %1860 = vmatpush1.msra.mxu0 %v1641
    %1861 = vmatprep.subr.mxu0 %v1644
    %1862 = vmatpush1.msra.mxu0 %v1643
    %1863 = vmatprep.subr.mxu0 %v1646
    %1864 = vmatpush1.msra.mxu0 %v1645
    %1865 = vmatprep.subr.mxu0 %v1648
    %1866 = vmatpush1.msra.mxu0 %v1647
    %1867 = vmatprep.subr.mxu0 %v1650
    %1868 = vmatpush1.msra.mxu0 %v1649
    %1869 = vmatprep.subr.mxu0 %v1652
    %1870 = vmatpush1.msra.mxu0 %v1651
    %1871 = vmatprep.subr.mxu0 %v1654
    %1872 = vmatpush1.msra.mxu0 %v1653
    %1873 = vmatprep.subr.mxu0 %v1656
    %1874 = vmatpush1.msra.mxu0 %v1655
    %1875 = vmatprep.subr.mxu0 %v1658
    %1876 = vmatpush1.msra.mxu0 %v1657
    %1877 = vmatprep.mubr.f32.mxu0 %v1465
    %1878 = vmatmul.mubr.f32.gmra.mrb[0].mxu0 %v1463
    %v1879 = vpop.f32.mrb[0].mxu0
    %v1880 = vadd.f32 %v1809, %v1879
    %v1881 = vpop.f32.mrb[0].mxu0
    %v1882 = vadd.f32 %v1811, %v1881
    %1883 = vdwg.mxu0
    %v1884 = vxor.u32 %v1880, 2147483648
    %v1885 = vxor.u32 %v1882, 2147483648
    %v1886 = vmul.f32 %v1884, 1.442695
    %v1887 = vpow.pop %v1886
    %v1888 = vmul.f32 %v1885, 1.442695
    %v1889 = vpow.pop %v1888
    %v1890 = vadd.f32 %v1887, 1.0
    %v1891 = vadd.f32 %v1889, 1.0
    %v1892 = vrcp.pop %v1890
    %v1893 = vmul.f32 1.0, %v1892
    %v1894 = vrcp.pop %v1891
    %v1895 = vmul.f32 1.0, %v1894
    %v1896 = vld [vmem:[#allocation17] sm:$0xff]
    %v1897 = vld [vmem:[#allocation17 + $0x8] sm:$0xff]
    %v1898 = vld [vmem:[#allocation17 + $0x10] sm:$0xff]
    %v1899 = vld [vmem:[#allocation17 + $0x18] sm:$0xff]
    %v1900 = vld [vmem:[#allocation17 + $0x20] sm:$0xff]
    %v1901 = vld [vmem:[#allocation17 + $0x28] sm:$0xff]
    %v1902 = vld [vmem:[#allocation17 + $0x30] sm:$0xff]
    %v1903 = vld [vmem:[#allocation17 + $0x38] sm:$0xff]
    %v1904 = vld [vmem:[#allocation17 + $0x40] sm:$0xff]
    %v1905 = vld [vmem:[#allocation17 + $0x48] sm:$0xff]
    %v1906 = vld [vmem:[#allocation17 + $0x50] sm:$0xff]
    %v1907 = vld [vmem:[#allocation17 + $0x58] sm:$0xff]
    %v1908 = vld [vmem:[#allocation17 + $0x60] sm:$0xff]
    %v1909 = vld [vmem:[#allocation17 + $0x68] sm:$0xff]
    %v1910 = vld [vmem:[#allocation17 + $0x70] sm:$0xff]
    %v1911 = vld [vmem:[#allocation17 + $0x78] sm:$0xff]
    %v1912 = vld [vmem:[#allocation17 + $0x80] sm:$0xff]
    %v1913 = vld [vmem:[#allocation17 + $0x88] sm:$0xff]
    %v1914 = vld [vmem:[#allocation17 + $0x90] sm:$0xff]
    %v1915 = vld [vmem:[#allocation17 + $0x98] sm:$0xff]
    %v1916 = vld [vmem:[#allocation17 + $0xa0] sm:$0xff]
    %v1917 = vld [vmem:[#allocation17 + $0xa8] sm:$0xff]
    %v1918 = vld [vmem:[#allocation17 + $0xb0] sm:$0xff]
    %v1919 = vld [vmem:[#allocation17 + $0xb8] sm:$0xff]
    %v1920 = vld [vmem:[#allocation17 + $0xc0] sm:$0xff]
    %v1921 = vld [vmem:[#allocation17 + $0xc8] sm:$0xff]
    %v1922 = vld [vmem:[#allocation17 + $0xd0] sm:$0xff]
    %v1923 = vld [vmem:[#allocation17 + $0xd8] sm:$0xff]
    %v1924 = vld [vmem:[#allocation17 + $0xe0] sm:$0xff]
    %v1925 = vld [vmem:[#allocation17 + $0xe8] sm:$0xff]
    %v1926 = vld [vmem:[#allocation17 + $0xf0] sm:$0xff]
    %v1927 = vld [vmem:[#allocation17 + $0xf8] sm:$0xff]
    %v1928 = vld [vmem:[#allocation17 + $0x100] sm:$0xff]
    %v1929 = vld [vmem:[#allocation17 + $0x108] sm:$0xff]
    %v1930 = vld [vmem:[#allocation17 + $0x110] sm:$0xff]
    %v1931 = vld [vmem:[#allocation17 + $0x118] sm:$0xff]
    %v1932 = vld [vmem:[#allocation17 + $0x120] sm:$0xff]
    %v1933 = vld [vmem:[#allocation17 + $0x128] sm:$0xff]
    %v1934 = vld [vmem:[#allocation17 + $0x130] sm:$0xff]
    %v1935 = vld [vmem:[#allocation17 + $0x138] sm:$0xff]
    %v1936 = vld [vmem:[#allocation17 + $0x140] sm:$0xff]
    %v1937 = vld [vmem:[#allocation17 + $0x148] sm:$0xff]
    %v1938 = vld [vmem:[#allocation17 + $0x150] sm:$0xff]
    %v1939 = vld [vmem:[#allocation17 + $0x158] sm:$0xff]
    %v1940 = vld [vmem:[#allocation17 + $0x160] sm:$0xff]
    %v1941 = vld [vmem:[#allocation17 + $0x168] sm:$0xff]
    %v1942 = vld [vmem:[#allocation17 + $0x170] sm:$0xff]
    %v1943 = vld [vmem:[#allocation17 + $0x178] sm:$0xff]
    %v1944 = vld [vmem:[#allocation17 + $0x180] sm:$0xff]
    %v1945 = vld [vmem:[#allocation17 + $0x188] sm:$0xff]
    %v1946 = vld [vmem:[#allocation17 + $0x190] sm:$0xff]
    %v1947 = vld [vmem:[#allocation17 + $0x198] sm:$0xff]
    %v1948 = vld [vmem:[#allocation17 + $0x1a0] sm:$0xff]
    %v1949 = vld [vmem:[#allocation17 + $0x1a8] sm:$0xff]
    %v1950 = vld [vmem:[#allocation17 + $0x1b0] sm:$0xff]
    %v1951 = vld [vmem:[#allocation17 + $0x1b8] sm:$0xff]
    %v1952 = vld [vmem:[#allocation17 + $0x1c0] sm:$0xff]
    %v1953 = vld [vmem:[#allocation17 + $0x1c8] sm:$0xff]
    %v1954 = vld [vmem:[#allocation17 + $0x1d0] sm:$0xff]
    %v1955 = vld [vmem:[#allocation17 + $0x1d8] sm:$0xff]
    %v1956 = vld [vmem:[#allocation17 + $0x1e0] sm:$0xff]
    %v1957 = vld [vmem:[#allocation17 + $0x1e8] sm:$0xff]
    %v1958 = vld [vmem:[#allocation17 + $0x1f0] sm:$0xff]
    %v1959 = vld [vmem:[#allocation17 + $0x1f8] sm:$0xff]
    %1960 = vmatprep.subr.mxu0 %v1897
    %1961 = vmatpush1.msra.mxu0 %v1896
    %1962 = vmatprep.subr.mxu0 %v1899
    %1963 = vmatpush1.msra.mxu0 %v1898
    %1964 = vmatprep.subr.mxu0 %v1901
    %1965 = vmatpush1.msra.mxu0 %v1900
    %1966 = vmatprep.subr.mxu0 %v1903
    %1967 = vmatpush1.msra.mxu0 %v1902
    %1968 = vmatprep.subr.mxu0 %v1905
    %1969 = vmatpush1.msra.mxu0 %v1904
    %1970 = vmatprep.subr.mxu0 %v1907
    %1971 = vmatpush1.msra.mxu0 %v1906
    %1972 = vmatprep.subr.mxu0 %v1909
    %1973 = vmatpush1.msra.mxu0 %v1908
    %1974 = vmatprep.subr.mxu0 %v1911
    %1975 = vmatpush1.msra.mxu0 %v1910
    %1976 = vmatprep.subr.mxu0 %v1913
    %1977 = vmatpush1.msra.mxu0 %v1912
    %1978 = vmatprep.subr.mxu0 %v1915
    %1979 = vmatpush1.msra.mxu0 %v1914
    %1980 = vmatprep.subr.mxu0 %v1917
    %1981 = vmatpush1.msra.mxu0 %v1916
    %1982 = vmatprep.subr.mxu0 %v1919
    %1983 = vmatpush1.msra.mxu0 %v1918
    %1984 = vmatprep.subr.mxu0 %v1921
    %1985 = vmatpush1.msra.mxu0 %v1920
    %1986 = vmatprep.subr.mxu0 %v1923
    %1987 = vmatpush1.msra.mxu0 %v1922
    %1988 = vmatprep.subr.mxu0 %v1925
    %1989 = vmatpush1.msra.mxu0 %v1924
    %1990 = vmatprep.subr.mxu0 %v1927
    %1991 = vmatpush1.msra.mxu0 %v1926
    %1992 = vmatprep.subr.mxu0 %v1929
    %1993 = vmatpush1.msra.mxu0 %v1928
    %1994 = vmatprep.subr.mxu0 %v1931
    %1995 = vmatpush1.msra.mxu0 %v1930
    %1996 = vmatprep.subr.mxu0 %v1933
    %1997 = vmatpush1.msra.mxu0 %v1932
    %1998 = vmatprep.subr.mxu0 %v1935
    %1999 = vmatpush1.msra.mxu0 %v1934
    %2000 = vmatprep.subr.mxu0 %v1937
    %2001 = vmatpush1.msra.mxu0 %v1936
    %2002 = vmatprep.subr.mxu0 %v1939
    %2003 = vmatpush1.msra.mxu0 %v1938
    %2004 = vmatprep.subr.mxu0 %v1941
    %2005 = vmatpush1.msra.mxu0 %v1940
    %2006 = vmatprep.subr.mxu0 %v1943
    %2007 = vmatpush1.msra.mxu0 %v1942
    %2008 = vmatprep.subr.mxu0 %v1945
    %2009 = vmatpush1.msra.mxu0 %v1944
    %2010 = vmatprep.subr.mxu0 %v1947
    %2011 = vmatpush1.msra.mxu0 %v1946
    %2012 = vmatprep.subr.mxu0 %v1949
    %2013 = vmatpush1.msra.mxu0 %v1948
    %2014 = vmatprep.subr.mxu0 %v1951
    %2015 = vmatpush1.msra.mxu0 %v1950
    %2016 = vmatprep.subr.mxu0 %v1953
    %2017 = vmatpush1.msra.mxu0 %v1952
    %2018 = vmatprep.subr.mxu0 %v1955
    %2019 = vmatpush1.msra.mxu0 %v1954
    %2020 = vmatprep.subr.mxu0 %v1957
    %2021 = vmatpush1.msra.mxu0 %v1956
    %2022 = vmatprep.subr.mxu0 %v1959
    %2023 = vmatpush1.msra.mxu0 %v1958
    %2024 = vmatprep.mubr.f32.mxu0 %v1895
    %2025 = vmatmul.mubr.f32.gmra.mrb[0].mxu0 %v1893
    %v2026 = vpop.f32.mrb[0].mxu0
    %v2027 = vadd.f32 0.0, %v2026
    %v2028 = vpop.f32.mrb[0].mxu0
    %v2029 = vadd.f32 0.0, %v2028
    %2030 = vdwg.mxu0
    %v2033 = vcombine.low %v2027, %v2029
    %v2035 = vunpack.c.l.s4 1983009808
    %v2036 = vunpack.c.0.s8 %v2035
    %v2037 = vlaneseq
    %v2038 = vshrl.u32 %v2037, 7
    %v2039 = vsub.s32 %v2036, %v2038
    %v2040 = vrot.slane %v2033, %v2039
    %2042 = vst [vmem:[%s21] sm:$0xf] %v2040
    %2043 = vst [vmem:[#allocation19] sm:$0x3] %v571
    %2044 = vst [vmem:[#allocation20] sm:$0x3] %v664
    %2045 = vst [vmem:[#allocation22] sm:$0x3] %v672
    // Predicated region
    $region126: #{vae_forward.1} parent=1 // pred_check
      _
    $region127: #{vae_forward.1} parent=1 // pred_check_branch
      %2047 = sbr.rel (0) target = $region129
    $region128: #{vae_forward.1} parent=1 // pred_region
      _
    $region129: #{vae_forward.1} parent=1 // pred_fallthru
      _
    // Predicated region
    $region130: #{vae_forward.1} parent=1 // pred_check
      _
    $region131: #{vae_forward.1} parent=1 // pred_check_branch
      %2049 = sbr.rel (0) target = $region133
    $region132: #{vae_forward.1} parent=1 // pred_region
      %s2051 = ssub.s32 32, 32
      %2052 = vsyncadd [#allocation4], %s2051
      %s2054 = sshll.u32 [#allocation19], 4
      %s2055 = int_to_ptr.vmem [resolvable:$true] %s2054
      %2057 = dma.vmem_to_hbm [thread:$0]  %s2055, 32, %s22, [#allocation4]
    $region133: #{vae_forward.1} parent=1 // pred_fallthru
      _
    // Predicated region
    $region134: #{vae_forward.1} parent=1 // pred_check
      _
    $region135: #{vae_forward.1} parent=1 // pred_check_branch
      %2059 = sbr.rel (0) target = $region137
    $region136: #{vae_forward.1} parent=1 // pred_region
      %s2061 = ssub.s32 32, 32
      %2062 = vsyncadd [#allocation21], %s2061
      %s2064 = sshll.u32 [#allocation20], 4
      %s2065 = int_to_ptr.vmem [resolvable:$true] %s2064
      %2067 = dma.vmem_to_hbm [thread:$0]  %s2065, 32, %s23, [#allocation21]
    $region137: #{vae_forward.1} parent=1 // pred_fallthru
      _
    // Predicated region
    $region138: #{vae_forward.1} parent=1 // pred_check
      _
    $region139: #{vae_forward.1} parent=1 // pred_check_branch
      %2069 = sbr.rel (0) target = $region141
    $region140: #{vae_forward.1} parent=1 // pred_region
      %s2071 = ssub.s32 32, 32
      %2072 = vsyncadd [#allocation21], %s2071
      %s2074 = sshll.u32 [#allocation22], 4
      %s2075 = int_to_ptr.vmem [resolvable:$true] %s2074
      %2077 = dma.vmem_to_hbm [thread:$0]  %s2075, 32, %s24, [#allocation21]
    $region141: #{vae_forward.1} parent=1 // pred_fallthru
      _
    // Predicated region
    $region142: #{vae_forward.1} parent=1 // pred_check
      _
    $region143: #{vae_forward.1} parent=1 // pred_check_branch
      %2079 = sbr.rel (0) target = $region145
    $region144: #{vae_forward.1} parent=1 // pred_region
      _
    $region145: #{vae_forward.1} parent=1 // pred_fallthru
      _
    // Predicated region
    $region146: #{vae_forward.1} parent=1 // pred_check
      _
    $region147: #{vae_forward.1} parent=1 // pred_check_branch
      %2081 = sbr.rel (0) target = $region149
    $region148: #{vae_forward.1} parent=1 // pred_region
      %2082 = dma.done [#allocation4], 32
    $region149: #{vae_forward.1} parent=1 // pred_fallthru
      _
    // Predicated region
    $region150: #{vae_forward.1} parent=1 // pred_check
      _
    $region151: #{vae_forward.1} parent=1 // pred_check_branch
      %2084 = sbr.rel (0) target = $region153
    $region152: #{vae_forward.1} parent=1 // pred_region
      %2085 = dma.done [#allocation21], 32
    $region153: #{vae_forward.1} parent=1 // pred_fallthru
      _
    // Predicated region
    $region154: #{vae_forward.1} parent=1 // pred_check
      _
    $region155: #{vae_forward.1} parent=1 // pred_check_branch
      %2087 = sbr.rel (0) target = $region157
    $region156: #{vae_forward.1} parent=1 // pred_region
      %2088 = dma.done [#allocation21], 32
    $region157: #{vae_forward.1} parent=1 // pred_fallthru
      _
    %2089 = vsyncpa [#allocation3], 1
    %2090 = vsyncpa [#allocation6], 1
    %2091 = vsyncpa [#allocation9], 1
    %2092 = vsyncpa [#allocation12], 1
    %2093 = vsyncpa [#allocation15], 1
    %2094 = vsyncpa [#allocation18], 1
    %2095 = vsyncpa [#allocation4], 1
    %2096 = vsyncpa [#allocation21], 1

</llo_original>
